<compile_context>
chip_gen: v6e
topology: v6e:2x2x1
jax: 0.10.0
libtpu: 0.0.40
codegen_flags: <defaults>
</compile_context>

<pallas_src>
import math
import functools

import jax
import jax.numpy as jnp
from jax.experimental import pallas as pl
from jax.experimental.pallas import tpu as pltpu


# ----------------------------- config ---------------------------------------
class Config:
    n_head = 4
    d_head = 8
    n_embd = 32          # hidden_size
    attn_pdrop = 0.0
    resid_pdrop = 0.0


# ----------------------------- kernel ---------------------------------------
def _attention_kernel(x_ref, w_attn_ref, b_attn_ref, w_proj_ref, b_proj_ref,
                      o_ref, *, batch, seq_len, n_head, d_head, scale):
    """Whole (batch-folded) forward pass in a single grid step.

    x_ref      : (B*S, H)        VMEM
    w_attn_ref : (H, 3*NH*DH)    VMEM   (c_attn weight, lane-dense, columns
                                         ordered [q heads | k heads | v heads])
    b_attn_ref : (1, 3*NH*DH)    VMEM
    w_proj_ref : (NH*DH, H)      VMEM   (c_proj weight, lane-dense)
    b_proj_ref : (1, H)          VMEM
    o_ref      : (B*S, H)        VMEM
    """
    B, S, NH, DH = batch, seq_len, n_head, d_head
    D = NH * DH

    x = x_ref[...]                                                    # (B*S, H)

    # --- fused QKV projection: one lane-dense MXU matmul -------------------
    qkv = jnp.dot(x, w_attn_ref[...],
                  preferred_element_type=jnp.float32) + b_attn_ref[...]  # (B*S, 3D)

    # --- per-(batch, head) scores, gathered for one batched softmax --------
    score_blocks = []
    v_blocks = []
    for b in range(B):
        row = slice(b * S, (b + 1) * S)
        for n in range(NH):
            q_bn = qkv[row, n * DH:(n + 1) * DH]                      # (S, DH)
            k_bn = qkv[row, D + n * DH:D + (n + 1) * DH]              # (S, DH)
            v_bn = qkv[row, 2 * D + n * DH:2 * D + (n + 1) * DH]      # (S, DH)
            s_bn = jax.lax.dot_general(
                q_bn, k_bn, (((1,), (1,)), ((), ())),
                preferred_element_type=jnp.float32) * scale           # (S, S)
            score_blocks.append(s_bn)
            v_blocks.append(v_bn)

    scores = jnp.concatenate(score_blocks, axis=0)                    # (B*NH*S, S)
    m = jnp.max(scores, axis=-1, keepdims=True)
    e = jnp.exp(scores - m)
    probs = e / jnp.sum(e, axis=-1, keepdims=True)                    # exact divide

    # --- probs @ V per head, heads concatenated back into lanes ------------
    ctx_rows = []
    for b in range(B):
        head_ctx = []
        for n in range(NH):
            idx = b * NH + n
            p_bn = probs[idx * S:(idx + 1) * S, :]                    # (S, S)
            head_ctx.append(jnp.dot(p_bn, v_blocks[idx],
                                    preferred_element_type=jnp.float32))  # (S, DH)
        ctx_rows.append(jnp.concatenate(head_ctx, axis=-1))           # (S, D)
    ctx = jnp.concatenate(ctx_rows, axis=0)                           # (B*S, D)

    # --- c_proj: single lane-dense matmul -----------------------------------
    y = jnp.dot(ctx, w_proj_ref[...],
                preferred_element_type=jnp.float32) + b_proj_ref[...]  # (B*S, H)
    o_ref[...] = y.astype(o_ref.dtype)


# ----------------------------- wrapper ---------------------------------------
def gpt3dev_attention(hidden_states, w_qkv, b_qkv, w_proj, b_proj, *,
                      n_head, d_head):
    """hidden_states: (B, S, H) float32. Returns (B, S, H) float32.

    w_qkv : (H, 3*NH*DH)  (in_features, out_features), columns = [q | k | v],
            heads contiguous within each component (matches nn.Linear column
            order used by split_heads in the PyTorch module).
    w_proj: (NH*DH, H)
    """
    B, S, H = hidden_states.shape
    D = n_head * d_head
    scale = 1.0 / math.sqrt(d_head)

    # ---- layout plumbing (outside the kernel) ------------------------------
    x2 = hidden_states.reshape(B * S, H)           # fold batch into rows
    b_attn2 = b_qkv.reshape(1, 3 * D)
    b_proj2 = b_proj.reshape(1, H)

    kernel = functools.partial(_attention_kernel, batch=B, seq_len=S,
                               n_head=n_head, d_head=d_head, scale=scale)

    def full(shape):
        return pl.BlockSpec(shape, lambda i, _n=len(shape): (0,) * _n)

    out = pl.pallas_call(
        kernel,
        out_shape=jax.ShapeDtypeStruct((B * S, H), hidden_states.dtype),
        grid_spec=pltpu.PrefetchScalarGridSpec(
            num_scalar_prefetch=0,
            grid=(1,),
            in_specs=[
                full((B * S, H)),        # x (batch folded into rows)
                full((H, 3 * D)),        # W_attn (lane-dense, one tile)
                full((1, 3 * D)),        # b_attn
                full((D, H)),            # W_proj (lane-dense)
                full((1, H)),            # b_proj
            ],
            out_specs=full((B * S, H)),
        ),
        compiler_params=pltpu.CompilerParams(
            dimension_semantics=("arbitrary",)),
    )(x2, w_qkv, b_attn2, w_proj, b_proj2)

    return out.reshape(B, S, H)


# ----------------------------- reference (pure JAX) ---------------------------
def reference_attention(x, w_qkv, b_qkv, w_proj, b_proj, *, n_head, d_head):
    B, S, H = x.shape
    D = n_head * d_head
    scale = 1.0 / math.sqrt(d_head)
    qkv = x @ w_qkv + b_qkv                                   # (B, S, 3*D)
    q, k, v = jnp.split(qkv, 3, axis=-1)

    def split_heads(t):
        return t.reshape(B, S, n_head, d_head).transpose(0, 2, 1, 3)

    q, k, v = split_heads(q), split_heads(k), split_heads(v)  # (B, NH, S, DH)
    scores = jnp.einsum('bhqd,bhkd->bhqk', q, k) * scale
    probs = jax.nn.softmax(scores, axis=-1)
    out = jnp.einsum('bhqk,bhkd->bhqd', probs, v)
    merged = out.transpose(0, 2, 1, 3).reshape(B, S, D)
    return merged @ w_proj + b_proj


# ----------------------------- main ------------------------------------------
if __name__ == "__main__":
    cfg = Config()
    B, S, H = 2, 8, cfg.n_embd
    D = cfg.n_head * cfg.d_head

    key = jax.random.PRNGKey(0)
    k_x, k_wq, k_bq, k_wp, k_bp = jax.random.split(key, 5)

    hidden_states = jax.random.normal(k_x, (B, S, H), dtype=jnp.float32)
    # deterministic synthetic parameters (no checkpoint load)
    w_qkv = jax.random.normal(k_wq, (H, 3 * D), dtype=jnp.float32) * 0.02
    b_qkv = jax.random.normal(k_bq, (3 * D,), dtype=jnp.float32) * 0.02
    w_proj = jax.random.normal(k_wp, (D, H), dtype=jnp.float32) * 0.02
    b_proj = jax.random.normal(k_bp, (H,), dtype=jnp.float32) * 0.02

    out = gpt3dev_attention(hidden_states, w_qkv, b_qkv, w_proj, b_proj,
                            n_head=cfg.n_head, d_head=cfg.d_head)
    out = jax.block_until_ready(out)

    ref = reference_attention(hidden_states, w_qkv, b_qkv, w_proj, b_proj,
                              n_head=cfg.n_head, d_head=cfg.d_head)

    assert out.shape == (B, S, H)
    assert jnp.allclose(out, ref, atol=1e-4, rtol=1e-4), "mismatch vs reference"
    print("KERNEL_OK")
</pallas_src>

<mosaic_0001>
module attributes {stable_mosaic.version = 11 : i64} {
  func.func @_attention_kernel(%arg0: i32, %arg1: memref<16x32xf32, #tpu.memory_space<vmem>>, %arg2: memref<32x96xf32, #tpu.memory_space<vmem>>, %arg3: memref<1x96xf32, #tpu.memory_space<vmem>>, %arg4: memref<32x32xf32, #tpu.memory_space<vmem>>, %arg5: memref<1x32xf32, #tpu.memory_space<vmem>>, %arg6: memref<16x32xf32, #tpu.memory_space<vmem>>) attributes {dimension_semantics = [#tpu.dimension_semantics<arbitrary>], iteration_bounds = array<i64: 1>, scalar_prefetch = 0 : i64, scratch_operands = 0 : i64, tpu.core_type = #tpu.core_type<tc>, window_params = [{pipeline_mode = #tpu.pipeline_mode<synchronous>, transform_indices = @transform_0, window_bounds = array<i64: 16, 32>}, {pipeline_mode = #tpu.pipeline_mode<synchronous>, transform_indices = @transform_1, window_bounds = array<i64: 32, 96>}, {pipeline_mode = #tpu.pipeline_mode<synchronous>, transform_indices = @transform_2, window_bounds = array<i64: 1, 96>}, {pipeline_mode = #tpu.pipeline_mode<synchronous>, transform_indices = @transform_3, window_bounds = array<i64: 32, 32>}, {pipeline_mode = #tpu.pipeline_mode<synchronous>, transform_indices = @transform_4, window_bounds = array<i64: 1, 32>}, {pipeline_mode = #tpu.pipeline_mode<synchronous>, transform_indices = @transform_5, window_bounds = array<i64: 16, 32>}]} {
    %c0 = arith.constant 0 : index
    %c0_0 = arith.constant 0 : index
    %0 = vector.load %arg1[%c0, %c0_0] : memref<16x32xf32, #tpu.memory_space<vmem>>, vector<16x32xf32>
    %c0_1 = arith.constant 0 : index
    %c0_2 = arith.constant 0 : index
    %1 = vector.load %arg2[%c0_1, %c0_2] : memref<32x96xf32, #tpu.memory_space<vmem>>, vector<32x96xf32>
    %cst = arith.constant dense<0.000000e+00> : vector<16x96xf32>
    %2 = tpu.matmul %0, %1, %cst {dimension_numbers = #tpu.dot_dimension_numbers<[1], [0], [0], [1], [0, 0, 1, 1], [], []>} : vector<16x32xf32>, vector<32x96xf32>, vector<16x96xf32> -> vector<16x96xf32>
    %c0_3 = arith.constant 0 : index
    %c0_4 = arith.constant 0 : index
    %3 = vector.load %arg3[%c0_3, %c0_4] : memref<1x96xf32, #tpu.memory_space<vmem>>, vector<1x96xf32>
    %4 = vector.broadcast %3 : vector<1x96xf32> to vector<16x96xf32>
    %5 = arith.addf %2, %4 : vector<16x96xf32>
    %6 = vector.extract_strided_slice %5 {offsets = [0, 0], sizes = [8, 8], strides = [1, 1]} : vector<16x96xf32> to vector<8x8xf32>
    %7 = vector.extract_strided_slice %5 {offsets = [0, 32], sizes = [8, 8], strides = [1, 1]} : vector<16x96xf32> to vector<8x8xf32>
    %8 = vector.extract_strided_slice %5 {offsets = [0, 64], sizes = [8, 8], strides = [1, 1]} : vector<16x96xf32> to vector<8x8xf32>
    %cst_5 = arith.constant dense<0.000000e+00> : vector<8x8xf32>
    %9 = tpu.matmul %6, %7, %cst_5 {dimension_numbers = #tpu.dot_dimension_numbers<[1], [1], [0], [0], [0, 0, 1, 0], [], []>} : vector<8x8xf32>, vector<8x8xf32>, vector<8x8xf32> -> vector<8x8xf32>
    %cst_6 = arith.constant 0.353553385 : f32
    %10 = vector.broadcast %cst_6 : f32 to vector<8x8xf32>
    %11 = arith.mulf %9, %10 : vector<8x8xf32>
    %12 = vector.extract_strided_slice %5 {offsets = [0, 8], sizes = [8, 8], strides = [1, 1]} : vector<16x96xf32> to vector<8x8xf32>
    %13 = vector.extract_strided_slice %5 {offsets = [0, 40], sizes = [8, 8], strides = [1, 1]} : vector<16x96xf32> to vector<8x8xf32>
    %14 = vector.extract_strided_slice %5 {offsets = [0, 72], sizes = [8, 8], strides = [1, 1]} : vector<16x96xf32> to vector<8x8xf32>
    %cst_7 = arith.constant dense<0.000000e+00> : vector<8x8xf32>
    %15 = tpu.matmul %12, %13, %cst_7 {dimension_numbers = #tpu.dot_dimension_numbers<[1], [1], [0], [0], [0, 0, 1, 0], [], []>} : vector<8x8xf32>, vector<8x8xf32>, vector<8x8xf32> -> vector<8x8xf32>
    %cst_8 = arith.constant 0.353553385 : f32
    %16 = vector.broadcast %cst_8 : f32 to vector<8x8xf32>
    %17 = arith.mulf %15, %16 : vector<8x8xf32>
    %18 = vector.extract_strided_slice %5 {offsets = [0, 16], sizes = [8, 8], strides = [1, 1]} : vector<16x96xf32> to vector<8x8xf32>
    %19 = vector.extract_strided_slice %5 {offsets = [0, 48], sizes = [8, 8], strides = [1, 1]} : vector<16x96xf32> to vector<8x8xf32>
    %20 = vector.extract_strided_slice %5 {offsets = [0, 80], sizes = [8, 8], strides = [1, 1]} : vector<16x96xf32> to vector<8x8xf32>
    %cst_9 = arith.constant dense<0.000000e+00> : vector<8x8xf32>
    %21 = tpu.matmul %18, %19, %cst_9 {dimension_numbers = #tpu.dot_dimension_numbers<[1], [1], [0], [0], [0, 0, 1, 0], [], []>} : vector<8x8xf32>, vector<8x8xf32>, vector<8x8xf32> -> vector<8x8xf32>
    %cst_10 = arith.constant 0.353553385 : f32
    %22 = vector.broadcast %cst_10 : f32 to vector<8x8xf32>
    %23 = arith.mulf %21, %22 : vector<8x8xf32>
    %24 = vector.extract_strided_slice %5 {offsets = [0, 24], sizes = [8, 8], strides = [1, 1]} : vector<16x96xf32> to vector<8x8xf32>
    %25 = vector.extract_strided_slice %5 {offsets = [0, 56], sizes = [8, 8], strides = [1, 1]} : vector<16x96xf32> to vector<8x8xf32>
    %26 = vector.extract_strided_slice %5 {offsets = [0, 88], sizes = [8, 8], strides = [1, 1]} : vector<16x96xf32> to vector<8x8xf32>
    %cst_11 = arith.constant dense<0.000000e+00> : vector<8x8xf32>
    %27 = tpu.matmul %24, %25, %cst_11 {dimension_numbers = #tpu.dot_dimension_numbers<[1], [1], [0], [0], [0, 0, 1, 0], [], []>} : vector<8x8xf32>, vector<8x8xf32>, vector<8x8xf32> -> vector<8x8xf32>
    %cst_12 = arith.constant 0.353553385 : f32
    %28 = vector.broadcast %cst_12 : f32 to vector<8x8xf32>
    %29 = arith.mulf %27, %28 : vector<8x8xf32>
    %30 = vector.extract_strided_slice %5 {offsets = [8, 0], sizes = [8, 8], strides = [1, 1]} : vector<16x96xf32> to vector<8x8xf32>
    %31 = vector.extract_strided_slice %5 {offsets = [8, 32], sizes = [8, 8], strides = [1, 1]} : vector<16x96xf32> to vector<8x8xf32>
    %32 = vector.extract_strided_slice %5 {offsets = [8, 64], sizes = [8, 8], strides = [1, 1]} : vector<16x96xf32> to vector<8x8xf32>
    %cst_13 = arith.constant dense<0.000000e+00> : vector<8x8xf32>
    %33 = tpu.matmul %30, %31, %cst_13 {dimension_numbers = #tpu.dot_dimension_numbers<[1], [1], [0], [0], [0, 0, 1, 0], [], []>} : vector<8x8xf32>, vector<8x8xf32>, vector<8x8xf32> -> vector<8x8xf32>
    %cst_14 = arith.constant 0.353553385 : f32
    %34 = vector.broadcast %cst_14 : f32 to vector<8x8xf32>
    %35 = arith.mulf %33, %34 : vector<8x8xf32>
    %36 = vector.extract_strided_slice %5 {offsets = [8, 8], sizes = [8, 8], strides = [1, 1]} : vector<16x96xf32> to vector<8x8xf32>
    %37 = vector.extract_strided_slice %5 {offsets = [8, 40], sizes = [8, 8], strides = [1, 1]} : vector<16x96xf32> to vector<8x8xf32>
    %38 = vector.extract_strided_slice %5 {offsets = [8, 72], sizes = [8, 8], strides = [1, 1]} : vector<16x96xf32> to vector<8x8xf32>
    %cst_15 = arith.constant dense<0.000000e+00> : vector<8x8xf32>
    %39 = tpu.matmul %36, %37, %cst_15 {dimension_numbers = #tpu.dot_dimension_numbers<[1], [1], [0], [0], [0, 0, 1, 0], [], []>} : vector<8x8xf32>, vector<8x8xf32>, vector<8x8xf32> -> vector<8x8xf32>
    %cst_16 = arith.constant 0.353553385 : f32
    %40 = vector.broadcast %cst_16 : f32 to vector<8x8xf32>
    %41 = arith.mulf %39, %40 : vector<8x8xf32>
    %42 = vector.extract_strided_slice %5 {offsets = [8, 16], sizes = [8, 8], strides = [1, 1]} : vector<16x96xf32> to vector<8x8xf32>
    %43 = vector.extract_strided_slice %5 {offsets = [8, 48], sizes = [8, 8], strides = [1, 1]} : vector<16x96xf32> to vector<8x8xf32>
    %44 = vector.extract_strided_slice %5 {offsets = [8, 80], sizes = [8, 8], strides = [1, 1]} : vector<16x96xf32> to vector<8x8xf32>
    %cst_17 = arith.constant dense<0.000000e+00> : vector<8x8xf32>
    %45 = tpu.matmul %42, %43, %cst_17 {dimension_numbers = #tpu.dot_dimension_numbers<[1], [1], [0], [0], [0, 0, 1, 0], [], []>} : vector<8x8xf32>, vector<8x8xf32>, vector<8x8xf32> -> vector<8x8xf32>
    %cst_18 = arith.constant 0.353553385 : f32
    %46 = vector.broadcast %cst_18 : f32 to vector<8x8xf32>
    %47 = arith.mulf %45, %46 : vector<8x8xf32>
    %48 = vector.extract_strided_slice %5 {offsets = [8, 24], sizes = [8, 8], strides = [1, 1]} : vector<16x96xf32> to vector<8x8xf32>
    %49 = vector.extract_strided_slice %5 {offsets = [8, 56], sizes = [8, 8], strides = [1, 1]} : vector<16x96xf32> to vector<8x8xf32>
    %50 = vector.extract_strided_slice %5 {offsets = [8, 88], sizes = [8, 8], strides = [1, 1]} : vector<16x96xf32> to vector<8x8xf32>
    %cst_19 = arith.constant dense<0.000000e+00> : vector<8x8xf32>
    %51 = tpu.matmul %48, %49, %cst_19 {dimension_numbers = #tpu.dot_dimension_numbers<[1], [1], [0], [0], [0, 0, 1, 0], [], []>} : vector<8x8xf32>, vector<8x8xf32>, vector<8x8xf32> -> vector<8x8xf32>
    %cst_20 = arith.constant 0.353553385 : f32
    %52 = vector.broadcast %cst_20 : f32 to vector<8x8xf32>
    %53 = arith.mulf %51, %52 : vector<8x8xf32>
    %54 = tpu.concatenate %11, %17, %23, %29, %35, %41, %47, %53 in 0 : vector<8x8xf32>, vector<8x8xf32>, vector<8x8xf32>, vector<8x8xf32>, vector<8x8xf32>, vector<8x8xf32>, vector<8x8xf32>, vector<8x8xf32> -> vector<64x8xf32>
    %cst_21 = arith.constant dense<0xFF800000> : vector<64xf32>
    %55 = vector.multi_reduction <maximumf>, %54, %cst_21 [1] : vector<64x8xf32> to vector<64xf32>
    %56 = vector.shape_cast %55 : vector<64xf32> to vector<64x1xf32>
    %57 = vector.broadcast %56 : vector<64x1xf32> to vector<64x8xf32>
    %58 = arith.subf %54, %57 : vector<64x8xf32>
    %59 = math.exp %58 : vector<64x8xf32>
    %cst_22 = arith.constant dense<0.000000e+00> : vector<64xf32>
    %60 = vector.multi_reduction <add>, %59, %cst_22 [1] : vector<64x8xf32> to vector<64xf32>
    %61 = vector.shape_cast %60 : vector<64xf32> to vector<64x1xf32>
    %62 = vector.broadcast %61 : vector<64x1xf32> to vector<64x8xf32>
    %63 = arith.divf %59, %62 : vector<64x8xf32>
    %64 = vector.extract_strided_slice %63 {offsets = [0, 0], sizes = [8, 8], strides = [1, 1]} : vector<64x8xf32> to vector<8x8xf32>
    %cst_23 = arith.constant dense<0.000000e+00> : vector<8x8xf32>
    %65 = tpu.matmul %64, %8, %cst_23 {dimension_numbers = #tpu.dot_dimension_numbers<[1], [0], [0], [1], [0, 0, 1, 1], [], []>} : vector<8x8xf32>, vector<8x8xf32>, vector<8x8xf32> -> vector<8x8xf32>
    %66 = vector.extract_strided_slice %63 {offsets = [8, 0], sizes = [8, 8], strides = [1, 1]} : vector<64x8xf32> to vector<8x8xf32>
    %cst_24 = arith.constant dense<0.000000e+00> : vector<8x8xf32>
    %67 = tpu.matmul %66, %14, %cst_24 {dimension_numbers = #tpu.dot_dimension_numbers<[1], [0], [0], [1], [0, 0, 1, 1], [], []>} : vector<8x8xf32>, vector<8x8xf32>, vector<8x8xf32> -> vector<8x8xf32>
    %68 = vector.extract_strided_slice %63 {offsets = [16, 0], sizes = [8, 8], strides = [1, 1]} : vector<64x8xf32> to vector<8x8xf32>
    %cst_25 = arith.constant dense<0.000000e+00> : vector<8x8xf32>
    %69 = tpu.matmul %68, %20, %cst_25 {dimension_numbers = #tpu.dot_dimension_numbers<[1], [0], [0], [1], [0, 0, 1, 1], [], []>} : vector<8x8xf32>, vector<8x8xf32>, vector<8x8xf32> -> vector<8x8xf32>
    %70 = vector.extract_strided_slice %63 {offsets = [24, 0], sizes = [8, 8], strides = [1, 1]} : vector<64x8xf32> to vector<8x8xf32>
    %cst_26 = arith.constant dense<0.000000e+00> : vector<8x8xf32>
    %71 = tpu.matmul %70, %26, %cst_26 {dimension_numbers = #tpu.dot_dimension_numbers<[1], [0], [0], [1], [0, 0, 1, 1], [], []>} : vector<8x8xf32>, vector<8x8xf32>, vector<8x8xf32> -> vector<8x8xf32>
    %72 = tpu.concatenate %65, %67, %69, %71 in 1 : vector<8x8xf32>, vector<8x8xf32>, vector<8x8xf32>, vector<8x8xf32> -> vector<8x32xf32>
    %73 = vector.extract_strided_slice %63 {offsets = [32, 0], sizes = [8, 8], strides = [1, 1]} : vector<64x8xf32> to vector<8x8xf32>
    %cst_27 = arith.constant dense<0.000000e+00> : vector<8x8xf32>
    %74 = tpu.matmul %73, %32, %cst_27 {dimension_numbers = #tpu.dot_dimension_numbers<[1], [0], [0], [1], [0, 0, 1, 1], [], []>} : vector<8x8xf32>, vector<8x8xf32>, vector<8x8xf32> -> vector<8x8xf32>
    %75 = vector.extract_strided_slice %63 {offsets = [40, 0], sizes = [8, 8], strides = [1, 1]} : vector<64x8xf32> to vector<8x8xf32>
    %cst_28 = arith.constant dense<0.000000e+00> : vector<8x8xf32>
    %76 = tpu.matmul %75, %38, %cst_28 {dimension_numbers = #tpu.dot_dimension_numbers<[1], [0], [0], [1], [0, 0, 1, 1], [], []>} : vector<8x8xf32>, vector<8x8xf32>, vector<8x8xf32> -> vector<8x8xf32>
    %77 = vector.extract_strided_slice %63 {offsets = [48, 0], sizes = [8, 8], strides = [1, 1]} : vector<64x8xf32> to vector<8x8xf32>
    %cst_29 = arith.constant dense<0.000000e+00> : vector<8x8xf32>
    %78 = tpu.matmul %77, %44, %cst_29 {dimension_numbers = #tpu.dot_dimension_numbers<[1], [0], [0], [1], [0, 0, 1, 1], [], []>} : vector<8x8xf32>, vector<8x8xf32>, vector<8x8xf32> -> vector<8x8xf32>
    %79 = vector.extract_strided_slice %63 {offsets = [56, 0], sizes = [8, 8], strides = [1, 1]} : vector<64x8xf32> to vector<8x8xf32>
    %cst_30 = arith.constant dense<0.000000e+00> : vector<8x8xf32>
    %80 = tpu.matmul %79, %50, %cst_30 {dimension_numbers = #tpu.dot_dimension_numbers<[1], [0], [0], [1], [0, 0, 1, 1], [], []>} : vector<8x8xf32>, vector<8x8xf32>, vector<8x8xf32> -> vector<8x8xf32>
    %81 = tpu.concatenate %74, %76, %78, %80 in 1 : vector<8x8xf32>, vector<8x8xf32>, vector<8x8xf32>, vector<8x8xf32> -> vector<8x32xf32>
    %82 = tpu.concatenate %72, %81 in 0 : vector<8x32xf32>, vector<8x32xf32> -> vector<16x32xf32>
    %c0_31 = arith.constant 0 : index
    %c0_32 = arith.constant 0 : index
    %83 = vector.load %arg4[%c0_31, %c0_32] : memref<32x32xf32, #tpu.memory_space<vmem>>, vector<32x32xf32>
    %cst_33 = arith.constant dense<0.000000e+00> : vector<16x32xf32>
    %84 = tpu.matmul %82, %83, %cst_33 {dimension_numbers = #tpu.dot_dimension_numbers<[1], [0], [0], [1], [0, 0, 1, 1], [], []>} : vector<16x32xf32>, vector<32x32xf32>, vector<16x32xf32> -> vector<16x32xf32>
    %c0_34 = arith.constant 0 : index
    %c0_35 = arith.constant 0 : index
    %85 = vector.load %arg5[%c0_34, %c0_35] : memref<1x32xf32, #tpu.memory_space<vmem>>, vector<1x32xf32>
    %86 = vector.broadcast %85 : vector<1x32xf32> to vector<16x32xf32>
    %87 = arith.addf %84, %86 : vector<16x32xf32>
    %c0_36 = arith.constant 0 : index
    %c0_37 = arith.constant 0 : index
    %88 = vector.load %arg6[%c0_36, %c0_37] : memref<16x32xf32, #tpu.memory_space<vmem>>, vector<16x32xf32>
    tpu.vector_store %arg6[%c0_36, %c0_37], %87 {strides = array<i32>} : memref<16x32xf32, #tpu.memory_space<vmem>>, vector<16x32xf32>,
    return
  }
  func.func @transform_0(%arg0: i32) -> (i32, i32) {
    %c0_i32 = arith.constant 0 : i32
    %c0_i32_0 = arith.constant 0 : i32
    %c0_i32_1 = arith.constant 0 : i32
    return %c0_i32, %c0_i32_0 : i32, i32
  }
  func.func @transform_1(%arg0: i32) -> (i32, i32) {
    %c0_i32 = arith.constant 0 : i32
    %c0_i32_0 = arith.constant 0 : i32
    %c0_i32_1 = arith.constant 0 : i32
    return %c0_i32, %c0_i32_0 : i32, i32
  }
  func.func @transform_2(%arg0: i32) -> (i32, i32) {
    %c0_i32 = arith.constant 0 : i32
    %c0_i32_0 = arith.constant 0 : i32
    %c0_i32_1 = arith.constant 0 : i32
    return %c0_i32, %c0_i32_0 : i32, i32
  }
  func.func @transform_3(%arg0: i32) -> (i32, i32) {
    %c0_i32 = arith.constant 0 : i32
    %c0_i32_0 = arith.constant 0 : i32
    %c0_i32_1 = arith.constant 0 : i32
    return %c0_i32, %c0_i32_0 : i32, i32
  }
  func.func @transform_4(%arg0: i32) -> (i32, i32) {
    %c0_i32 = arith.constant 0 : i32
    %c0_i32_0 = arith.constant 0 : i32
    %c0_i32_1 = arith.constant 0 : i32
    return %c0_i32, %c0_i32_0 : i32, i32
  }
  func.func @transform_5(%arg0: i32) -> (i32, i32) {
    %c0_i32 = arith.constant 0 : i32
    %c0_i32_0 = arith.constant 0 : i32
    %c0_i32_1 = arith.constant 0 : i32
    return %c0_i32, %c0_i32_0 : i32, i32
  }
}

</mosaic_0001>

<llo_original>
// kernel: tpu_custom_call.1
$region0: #{tpu_custom_call.1}
  #allocation0 [shape = 'u32[]', space=smem, size = 0x4, offset = 0x4, fixed_abs, tag = 'smem constant byte address 0x4 - core index']
  #allocation1 [shape = 'u32[144,128]{1,0:T(1,128)}', space=vmem, size = 0x12000, scoped, tag = 'internal scratch']
  %s0 = inlined_call_operand.hbm [shape: f32[16,32], index: 0, kind: input, shape index: {}]
  %s1 = inlined_call_operand.hbm [shape: f32[32,96], index: 1, kind: input, shape index: {}]
  %s2 = inlined_call_operand.vmem [shape: f32[1,96], index: 2, kind: input, shape index: {}]
  %s3 = inlined_call_operand.hbm [shape: f32[32,32], index: 3, kind: input, shape index: {}]
  %s4 = inlined_call_operand.vmem [shape: f32[1,32], index: 4, kind: input, shape index: {}]
  %s5 = inlined_call_operand.hbm [shape: f32[16,32], index: 5, kind: output, shape index: {}]
  %s6 = sld [smem:[#allocation0]]
  $region42: #{tpu_custom_call.1} parent=0
    _
  %s8 = ssub.s32 1, %s6
  %s9 = scalar_select 0, %s8, %s6
  $region1: #{tpu_custom_call.1} parent=0
    #allocation2 [shape = 'u8[8192]{0}', space=vmem, size = 0x2000, scoped, tag = 'input window, operand 0, single buffered']
    #allocation3 [shape = 's32[1]{0}', space=sflag, size = 0x4, scoped, tag = 'scoped memory for tpu_custom_call.1']
    #allocation4 [shape = 's32[1]{0}', space=sflag, size = 0x4, scoped, tag = 'scoped memory for tpu_custom_call.1']
    #allocation5 [shape = 'u8[16384]{0}', space=vmem, size = 0x4000, scoped, tag = 'input window, operand 1, single buffered']
    #allocation6 [shape = 's32[1]{0}', space=sflag, size = 0x4, scoped, tag = 'scoped memory for tpu_custom_call.1']
    #allocation7 [shape = 'u8[16384]{0}', space=vmem, size = 0x4000, scoped, tag = 'input window, operand 3, single buffered']
    #allocation8 [shape = 'u8[8192]{0}', space=vmem, size = 0x2000, scoped, tag = 'output window, operand 0, single buffered']
    %10 = vsyncpa [#allocation3], 0
    %11 = vsyncpa [#allocation6], 0
    %12 = vsyncpa [#allocation4], 0
    // Predicated region
    $region2: #{tpu_custom_call.1} parent=1 // pred_check
      _
    $region3: #{tpu_custom_call.1} parent=1 // pred_check_branch
      %14 = sbr.rel (0) target = $region5
    $region4: #{tpu_custom_call.1} parent=1 // pred_region
      %s16 = ssub.s32 256, 256
      %17 = vsyncadd [#allocation3], %s16
      %s18 = sshll.u32 [#allocation2], 4
      %s19 = int_to_ptr.vmem [resolvable:$true] %s18
      %24 = dma.hbm_to_vmem [thread:$0]  %s0, 256, %s19, [#allocation3], 128, 128, 8
    $region5: #{tpu_custom_call.1} parent=1 // pred_fallthru
      _
    // Predicated region
    $region6: #{tpu_custom_call.1} parent=1 // pred_check
      _
    $region7: #{tpu_custom_call.1} parent=1 // pred_check_branch
      %26 = sbr.rel (0) target = $region9
    $region8: #{tpu_custom_call.1} parent=1 // pred_region
      %s28 = ssub.s32 512, 512
      %29 = vsyncadd [#allocation6], %s28
      %s30 = sshll.u32 [#allocation5], 4
      %s31 = int_to_ptr.vmem [resolvable:$true] %s30
      %36 = dma.hbm_to_vmem [thread:$0]  %s1, 512, %s31, [#allocation6], 128, 128, 8
    $region9: #{tpu_custom_call.1} parent=1 // pred_fallthru
      _
    // Predicated region
    $region10: #{tpu_custom_call.1} parent=1 // pred_check
      _
    $region11: #{tpu_custom_call.1} parent=1 // pred_check_branch
      %38 = sbr.rel (0) target = $region13
    $region12: #{tpu_custom_call.1} parent=1 // pred_region
      _
    $region13: #{tpu_custom_call.1} parent=1 // pred_fallthru
      _
    // Predicated region
    $region14: #{tpu_custom_call.1} parent=1 // pred_check
      _
    $region15: #{tpu_custom_call.1} parent=1 // pred_check_branch
      %40 = sbr.rel (0) target = $region17
    $region16: #{tpu_custom_call.1} parent=1 // pred_region
      %s42 = ssub.s32 512, 512
      %43 = vsyncadd [#allocation6], %s42
      %s44 = sshll.u32 [#allocation7], 4
      %s45 = int_to_ptr.vmem [resolvable:$true] %s44
      %50 = dma.hbm_to_vmem [thread:$0]  %s3, 512, %s45, [#allocation6], 128, 128, 8
    $region17: #{tpu_custom_call.1} parent=1 // pred_fallthru
      _
    // Predicated region
    $region18: #{tpu_custom_call.1} parent=1 // pred_check
      _
    $region19: #{tpu_custom_call.1} parent=1 // pred_check_branch
      %52 = sbr.rel (0) target = $region21
    $region20: #{tpu_custom_call.1} parent=1 // pred_region
      _
    $region21: #{tpu_custom_call.1} parent=1 // pred_fallthru
      _
    // Predicated region
    $region22: #{tpu_custom_call.1} parent=1 // pred_check
      _
    $region23: #{tpu_custom_call.1} parent=1 // pred_check_branch
      %54 = sbr.rel (0) target = $region25
    $region24: #{tpu_custom_call.1} parent=1 // pred_region
      %55 = dma.done [#allocation3], 256
    $region25: #{tpu_custom_call.1} parent=1 // pred_fallthru
      _
    // Predicated region
    $region26: #{tpu_custom_call.1} parent=1 // pred_check
      _
    $region27: #{tpu_custom_call.1} parent=1 // pred_check_branch
      %57 = sbr.rel (0) target = $region29
    $region28: #{tpu_custom_call.1} parent=1 // pred_region
      %58 = dma.done [#allocation6], 512
    $region29: #{tpu_custom_call.1} parent=1 // pred_fallthru
      _
    // Predicated region
    $region30: #{tpu_custom_call.1} parent=1 // pred_check
      _
    $region31: #{tpu_custom_call.1} parent=1 // pred_check_branch
      %60 = sbr.rel (0) target = $region33
    $region32: #{tpu_custom_call.1} parent=1 // pred_region
      %61 = dma.done [#allocation6], 512
    $region33: #{tpu_custom_call.1} parent=1 // pred_fallthru
      _
    %v62 = vld [vmem:[#allocation2] sm:$0xff]
    %v63 = vld [vmem:[#allocation2 + $0x8] sm:$0xff]
    %v64 = vld [vmem:[#allocation5] sm:$0xff]
    %v65 = vld [vmem:[#allocation5 + $0x8] sm:$0xff]
    %v66 = vld [vmem:[#allocation5 + $0x10] sm:$0xff]
    %v67 = vld [vmem:[#allocation5 + $0x18] sm:$0xff]
    %v68 = vld [vmem:[%s2] sm:$0x1]
    %v70 = vlaneseq
    %v71 = vshrl.u32 %v70, 7
    %v72 = vsub.s32 0, %v71
    %v73 = vrot.slane %v68, %v72
    %vm75 = vcmask 261120
    %v77 = vsel %vm75, %v62, 0
    %v80 = vsel %vm75, %v63, 0
    %82 = vmatprep.subr.mxu0 0.0
    %83 = vmatpush1.msra.mxu0 0.0
    %84 = vmatprep.subr.mxu0 0.0
    %85 = vmatpush1.msra.mxu0 0.0
    %86 = vmatprep.subr.mxu0 0.0
    %87 = vmatpush1.msra.mxu0 0.0
    %88 = vmatprep.subr.mxu0 0.0
    %89 = vmatpush1.msra.mxu0 0.0
    %90 = vmatprep.subr.mxu0 0.0
    %91 = vmatpush1.msra.mxu0 0.0
    %92 = vmatprep.subr.mxu0 0.0
    %93 = vmatpush1.msra.mxu0 0.0
    %94 = vmatprep.subr.mxu0 0.0
    %95 = vmatpush1.msra.mxu0 0.0
    %96 = vmatprep.subr.mxu0 0.0
    %97 = vmatpush1.msra.mxu0 0.0
    %98 = vmatprep.subr.mxu0 0.0
    %99 = vmatpush1.msra.mxu0 0.0
    %100 = vmatprep.subr.mxu0 0.0
    %101 = vmatpush1.msra.mxu0 0.0
    %102 = vmatprep.subr.mxu0 0.0
    %103 = vmatpush1.msra.mxu0 0.0
    %104 = vmatprep.subr.mxu0 0.0
    %105 = vmatpush1.msra.mxu0 0.0
    %106 = vmatprep.subr.mxu0 0.0
    %107 = vmatpush1.msra.mxu0 %v67
    %108 = vmatprep.subr.mxu0 0.0
    %109 = vmatpush1.msra.mxu0 %v66
    %110 = vmatprep.subr.mxu0 0.0
    %111 = vmatpush1.msra.mxu0 %v65
    %112 = vmatprep.subr.mxu0 0.0
    %113 = vmatpush1.msra.mxu0 %v64
    %114 = vmatprep.subr.mxu0 0.0
    %115 = vmatpush2.msra.mxu0 0.0
    %116 = vmatprep.subr.mxu0 0.0
    %117 = vmatpush2.msra.mxu0 0.0
    %118 = vmatprep.subr.mxu0 0.0
    %119 = vmatpush2.msra.mxu0 0.0
    %120 = vmatprep.subr.mxu0 0.0
    %121 = vmatpush2.msra.mxu0 0.0
    %122 = vmatprep.subr.mxu0 0.0
    %123 = vmatpush2.msra.mxu0 0.0
    %124 = vmatprep.subr.mxu0 0.0
    %125 = vmatpush2.msra.mxu0 0.0
    %126 = vmatprep.subr.mxu0 0.0
    %127 = vmatpush2.msra.mxu0 0.0
    %128 = vmatprep.subr.mxu0 0.0
    %129 = vmatpush2.msra.mxu0 0.0
    %130 = vmatprep.subr.mxu0 0.0
    %131 = vmatpush2.msra.mxu0 0.0
    %132 = vmatprep.subr.mxu0 0.0
    %133 = vmatpush2.msra.mxu0 0.0
    %134 = vmatprep.subr.mxu0 0.0
    %135 = vmatpush2.msra.mxu0 0.0
    %136 = vmatprep.subr.mxu0 0.0
    %137 = vmatpush2.msra.mxu0 0.0
    %138 = vmatprep.subr.mxu0 0.0
    %139 = vmatpush2.msra.mxu0 0.0
    %140 = vmatprep.subr.mxu0 0.0
    %141 = vmatpush2.msra.mxu0 0.0
    %142 = vmatprep.subr.mxu0 0.0
    %143 = vmatpush2.msra.mxu0 0.0
    %144 = vmatprep.subr.mxu0 0.0
    %145 = vmatpush2.msra.mxu0 0.0
    %146 = vmatprep.mubr.f32.mxu0 0.0
    %147 = vmatmul.mubr.f32.gmra.mxu0 %v77
    %v148 = vpop.f32.mrf.mxu0
    %v149 = vadd.f32 %v73, %v148
    %v150 = vpop.f32.mrf.mxu0
    %151 = vmatprep.mubr.f32.mxu0 0.0
    %152 = vmatmul.mubr.f32.gmra.mxu0 %v80
    %v153 = vpop.f32.mrf.mxu0
    %v154 = vadd.f32 %v73, %v153
    %v155 = vpop.f32.mrf.mxu0
    %156 = vdwg.mxu0
    %158 = vrot.lane.b32.xlu0 %v149, 96
    %v159 = vpop.permute.xlu0 %158
    %vm160 = vcmask 64512
    %v161 = vsel %vm160, %v149, 0
    %v163 = vsel %vm160, %v159, 0
    %165 = vmatprep.subr.mxu0 0.0
    %166 = vmatpush1.xpose.msra.mxu0 0.0
    %167 = vmatprep.subr.mxu0 0.0
    %168 = vmatpush1.xpose.msra.mxu0 0.0
    %169 = vmatprep.subr.mxu0 0.0
    %170 = vmatpush1.xpose.msra.mxu0 0.0
    %171 = vmatprep.subr.mxu0 0.0
    %172 = vmatpush1.xpose.msra.mxu0 0.0
    %173 = vmatprep.subr.mxu0 0.0
    %174 = vmatpush1.xpose.msra.mxu0 0.0
    %175 = vmatprep.subr.mxu0 0.0
    %176 = vmatpush1.xpose.msra.mxu0 0.0
    %177 = vmatprep.subr.mxu0 0.0
    %178 = vmatpush1.xpose.msra.mxu0 0.0
    %179 = vmatprep.subr.mxu0 0.0
    %180 = vmatpush1.xpose.msra.mxu0 0.0
    %181 = vmatprep.subr.mxu0 0.0
    %182 = vmatpush1.xpose.msra.mxu0 0.0
    %183 = vmatprep.subr.mxu0 0.0
    %184 = vmatpush1.xpose.msra.mxu0 0.0
    %185 = vmatprep.subr.mxu0 0.0
    %186 = vmatpush1.xpose.msra.mxu0 0.0
    %187 = vmatprep.subr.mxu0 0.0
    %188 = vmatpush1.xpose.msra.mxu0 0.0
    %189 = vmatprep.subr.mxu0 0.0
    %190 = vmatpush1.xpose.msra.mxu0 0.0
    %191 = vmatprep.subr.mxu0 0.0
    %192 = vmatpush1.xpose.msra.mxu0 0.0
    %193 = vmatprep.subr.mxu0 0.0
    %194 = vmatpush1.xpose.msra.mxu0 0.0
    %195 = vmatprep.subr.mxu0 0.0
    %196 = vmatpush1.xpose.msra.mxu0 %v163
    %197 = vmatprep.subr.mxu0 0.0
    %198 = vmatpush2.xpose.msra.mxu0 0.0
    %199 = vmatprep.subr.mxu0 0.0
    %200 = vmatpush2.xpose.msra.mxu0 0.0
    %201 = vmatprep.subr.mxu0 0.0
    %202 = vmatpush2.xpose.msra.mxu0 0.0
    %203 = vmatprep.subr.mxu0 0.0
    %204 = vmatpush2.xpose.msra.mxu0 0.0
    %205 = vmatprep.subr.mxu0 0.0
    %206 = vmatpush2.xpose.msra.mxu0 0.0
    %207 = vmatprep.subr.mxu0 0.0
    %208 = vmatpush2.xpose.msra.mxu0 0.0
    %209 = vmatprep.subr.mxu0 0.0
    %210 = vmatpush2.xpose.msra.mxu0 0.0
    %211 = vmatprep.subr.mxu0 0.0
    %212 = vmatpush2.xpose.msra.mxu0 0.0
    %213 = vmatprep.subr.mxu0 0.0
    %214 = vmatpush2.xpose.msra.mxu0 0.0
    %215 = vmatprep.subr.mxu0 0.0
    %216 = vmatpush2.xpose.msra.mxu0 0.0
    %217 = vmatprep.subr.mxu0 0.0
    %218 = vmatpush2.xpose.msra.mxu0 0.0
    %219 = vmatprep.subr.mxu0 0.0
    %220 = vmatpush2.xpose.msra.mxu0 0.0
    %221 = vmatprep.subr.mxu0 0.0
    %222 = vmatpush2.xpose.msra.mxu0 0.0
    %223 = vmatprep.subr.mxu0 0.0
    %224 = vmatpush2.xpose.msra.mxu0 0.0
    %225 = vmatprep.subr.mxu0 0.0
    %226 = vmatpush2.xpose.msra.mxu0 0.0
    %227 = vmatprep.subr.mxu0 0.0
    %228 = vmatpush2.xpose.msra.mxu0 0.0
    %229 = vmatprep.mubr.f32.mxu0 0.0
    %230 = vmatmul.mubr.f32.gmra.mxu0 %v161
    %v231 = vpop.f32.mrf.mxu0
    %v232 = vadd.f32 0.0, %v231
    %v233 = vpop.f32.mrf.mxu0
    %234 = vdwg.mxu0
    %v235 = vmul.f32 %v232, 0.35355338
    %236 = vrot.lane.b32.xlu0 %v149, 120
    %v237 = vpop.permute.xlu0 %236
    %238 = vrot.lane.b32.xlu0 %v149, 88
    %v239 = vpop.permute.xlu0 %238
    %v240 = vsel %vm160, %v237, 0
    %v242 = vsel %vm160, %v239, 0
    %244 = vmatprep.subr.mxu0 0.0
    %245 = vmatpush1.xpose.msra.mxu0 0.0
    %246 = vmatprep.subr.mxu0 0.0
    %247 = vmatpush1.xpose.msra.mxu0 0.0
    %248 = vmatprep.subr.mxu0 0.0
    %249 = vmatpush1.xpose.msra.mxu0 0.0
    %250 = vmatprep.subr.mxu0 0.0
    %251 = vmatpush1.xpose.msra.mxu0 0.0
    %252 = vmatprep.subr.mxu0 0.0
    %253 = vmatpush1.xpose.msra.mxu0 0.0
    %254 = vmatprep.subr.mxu0 0.0
    %255 = vmatpush1.xpose.msra.mxu0 0.0
    %256 = vmatprep.subr.mxu0 0.0
    %257 = vmatpush1.xpose.msra.mxu0 0.0
    %258 = vmatprep.subr.mxu0 0.0
    %259 = vmatpush1.xpose.msra.mxu0 0.0
    %260 = vmatprep.subr.mxu0 0.0
    %261 = vmatpush1.xpose.msra.mxu0 0.0
    %262 = vmatprep.subr.mxu0 0.0
    %263 = vmatpush1.xpose.msra.mxu0 0.0
    %264 = vmatprep.subr.mxu0 0.0
    %265 = vmatpush1.xpose.msra.mxu0 0.0
    %266 = vmatprep.subr.mxu0 0.0
    %267 = vmatpush1.xpose.msra.mxu0 0.0
    %268 = vmatprep.subr.mxu0 0.0
    %269 = vmatpush1.xpose.msra.mxu0 0.0
    %270 = vmatprep.subr.mxu0 0.0
    %271 = vmatpush1.xpose.msra.mxu0 0.0
    %272 = vmatprep.subr.mxu0 0.0
    %273 = vmatpush1.xpose.msra.mxu0 0.0
    %274 = vmatprep.subr.mxu0 0.0
    %275 = vmatpush1.xpose.msra.mxu0 %v242
    %276 = vmatprep.subr.mxu0 0.0
    %277 = vmatpush2.xpose.msra.mxu0 0.0
    %278 = vmatprep.subr.mxu0 0.0
    %279 = vmatpush2.xpose.msra.mxu0 0.0
    %280 = vmatprep.subr.mxu0 0.0
    %281 = vmatpush2.xpose.msra.mxu0 0.0
    %282 = vmatprep.subr.mxu0 0.0
    %283 = vmatpush2.xpose.msra.mxu0 0.0
    %284 = vmatprep.subr.mxu0 0.0
    %285 = vmatpush2.xpose.msra.mxu0 0.0
    %286 = vmatprep.subr.mxu0 0.0
    %287 = vmatpush2.xpose.msra.mxu0 0.0
    %288 = vmatprep.subr.mxu0 0.0
    %289 = vmatpush2.xpose.msra.mxu0 0.0
    %290 = vmatprep.subr.mxu0 0.0
    %291 = vmatpush2.xpose.msra.mxu0 0.0
    %292 = vmatprep.subr.mxu0 0.0
    %293 = vmatpush2.xpose.msra.mxu0 0.0
    %294 = vmatprep.subr.mxu0 0.0
    %295 = vmatpush2.xpose.msra.mxu0 0.0
    %296 = vmatprep.subr.mxu0 0.0
    %297 = vmatpush2.xpose.msra.mxu0 0.0
    %298 = vmatprep.subr.mxu0 0.0
    %299 = vmatpush2.xpose.msra.mxu0 0.0
    %300 = vmatprep.subr.mxu0 0.0
    %301 = vmatpush2.xpose.msra.mxu0 0.0
    %302 = vmatprep.subr.mxu0 0.0
    %303 = vmatpush2.xpose.msra.mxu0 0.0
    %304 = vmatprep.subr.mxu0 0.0
    %305 = vmatpush2.xpose.msra.mxu0 0.0
    %306 = vmatprep.subr.mxu0 0.0
    %307 = vmatpush2.xpose.msra.mxu0 0.0
    %308 = vmatprep.mubr.f32.mxu0 0.0
    %309 = vmatmul.mubr.f32.gmra.mxu0 %v240
    %v310 = vpop.f32.mrf.mxu0
    %v311 = vadd.f32 0.0, %v310
    %v312 = vpop.f32.mrf.mxu0
    %313 = vdwg.mxu0
    %v314 = vmul.f32 %v311, 0.35355338
    %315 = vrot.lane.b32.xlu0 %v149, 112
    %v316 = vpop.permute.xlu0 %315
    %317 = vrot.lane.b32.xlu0 %v149, 80
    %v318 = vpop.permute.xlu0 %317
    %v319 = vsel %vm160, %v316, 0
    %v321 = vsel %vm160, %v318, 0
    %323 = vmatprep.subr.mxu0 0.0
    %324 = vmatpush1.xpose.msra.mxu0 0.0
    %325 = vmatprep.subr.mxu0 0.0
    %326 = vmatpush1.xpose.msra.mxu0 0.0
    %327 = vmatprep.subr.mxu0 0.0
    %328 = vmatpush1.xpose.msra.mxu0 0.0
    %329 = vmatprep.subr.mxu0 0.0
    %330 = vmatpush1.xpose.msra.mxu0 0.0
    %331 = vmatprep.subr.mxu0 0.0
    %332 = vmatpush1.xpose.msra.mxu0 0.0
    %333 = vmatprep.subr.mxu0 0.0
    %334 = vmatpush1.xpose.msra.mxu0 0.0
    %335 = vmatprep.subr.mxu0 0.0
    %336 = vmatpush1.xpose.msra.mxu0 0.0
    %337 = vmatprep.subr.mxu0 0.0
    %338 = vmatpush1.xpose.msra.mxu0 0.0
    %339 = vmatprep.subr.mxu0 0.0
    %340 = vmatpush1.xpose.msra.mxu0 0.0
    %341 = vmatprep.subr.mxu0 0.0
    %342 = vmatpush1.xpose.msra.mxu0 0.0
    %343 = vmatprep.subr.mxu0 0.0
    %344 = vmatpush1.xpose.msra.mxu0 0.0
    %345 = vmatprep.subr.mxu0 0.0
    %346 = vmatpush1.xpose.msra.mxu0 0.0
    %347 = vmatprep.subr.mxu0 0.0
    %348 = vmatpush1.xpose.msra.mxu0 0.0
    %349 = vmatprep.subr.mxu0 0.0
    %350 = vmatpush1.xpose.msra.mxu0 0.0
    %351 = vmatprep.subr.mxu0 0.0
    %352 = vmatpush1.xpose.msra.mxu0 0.0
    %353 = vmatprep.subr.mxu0 0.0
    %354 = vmatpush1.xpose.msra.mxu0 %v321
    %355 = vmatprep.subr.mxu0 0.0
    %356 = vmatpush2.xpose.msra.mxu0 0.0
    %357 = vmatprep.subr.mxu0 0.0
    %358 = vmatpush2.xpose.msra.mxu0 0.0
    %359 = vmatprep.subr.mxu0 0.0
    %360 = vmatpush2.xpose.msra.mxu0 0.0
    %361 = vmatprep.subr.mxu0 0.0
    %362 = vmatpush2.xpose.msra.mxu0 0.0
    %363 = vmatprep.subr.mxu0 0.0
    %364 = vmatpush2.xpose.msra.mxu0 0.0
    %365 = vmatprep.subr.mxu0 0.0
    %366 = vmatpush2.xpose.msra.mxu0 0.0
    %367 = vmatprep.subr.mxu0 0.0
    %368 = vmatpush2.xpose.msra.mxu0 0.0
    %369 = vmatprep.subr.mxu0 0.0
    %370 = vmatpush2.xpose.msra.mxu0 0.0
    %371 = vmatprep.subr.mxu0 0.0
    %372 = vmatpush2.xpose.msra.mxu0 0.0
    %373 = vmatprep.subr.mxu0 0.0
    %374 = vmatpush2.xpose.msra.mxu0 0.0
    %375 = vmatprep.subr.mxu0 0.0
    %376 = vmatpush2.xpose.msra.mxu0 0.0
    %377 = vmatprep.subr.mxu0 0.0
    %378 = vmatpush2.xpose.msra.mxu0 0.0
    %379 = vmatprep.subr.mxu0 0.0
    %380 = vmatpush2.xpose.msra.mxu0 0.0
    %381 = vmatprep.subr.mxu0 0.0
    %382 = vmatpush2.xpose.msra.mxu0 0.0
    %383 = vmatprep.subr.mxu0 0.0
    %384 = vmatpush2.xpose.msra.mxu0 0.0
    %385 = vmatprep.subr.mxu0 0.0
    %386 = vmatpush2.xpose.msra.mxu0 0.0
    %387 = vmatprep.mubr.f32.mxu0 0.0
    %388 = vmatmul.mubr.f32.gmra.mxu0 %v319
    %v389 = vpop.f32.mrf.mxu0
    %v390 = vadd.f32 0.0, %v389
    %v391 = vpop.f32.mrf.mxu0
    %392 = vdwg.mxu0
    %v393 = vmul.f32 %v390, 0.35355338
    %394 = vrot.lane.b32.xlu0 %v149, 104
    %v395 = vpop.permute.xlu0 %394
    %396 = vrot.lane.b32.xlu0 %v149, 72
    %v397 = vpop.permute.xlu0 %396
    %v398 = vsel %vm160, %v395, 0
    %v400 = vsel %vm160, %v397, 0
    %402 = vmatprep.subr.mxu0 0.0
    %403 = vmatpush1.xpose.msra.mxu0 0.0
    %404 = vmatprep.subr.mxu0 0.0
    %405 = vmatpush1.xpose.msra.mxu0 0.0
    %406 = vmatprep.subr.mxu0 0.0
    %407 = vmatpush1.xpose.msra.mxu0 0.0
    %408 = vmatprep.subr.mxu0 0.0
    %409 = vmatpush1.xpose.msra.mxu0 0.0
    %410 = vmatprep.subr.mxu0 0.0
    %411 = vmatpush1.xpose.msra.mxu0 0.0
    %412 = vmatprep.subr.mxu0 0.0
    %413 = vmatpush1.xpose.msra.mxu0 0.0
    %414 = vmatprep.subr.mxu0 0.0
    %415 = vmatpush1.xpose.msra.mxu0 0.0
    %416 = vmatprep.subr.mxu0 0.0
    %417 = vmatpush1.xpose.msra.mxu0 0.0
    %418 = vmatprep.subr.mxu0 0.0
    %419 = vmatpush1.xpose.msra.mxu0 0.0
    %420 = vmatprep.subr.mxu0 0.0
    %421 = vmatpush1.xpose.msra.mxu0 0.0
    %422 = vmatprep.subr.mxu0 0.0
    %423 = vmatpush1.xpose.msra.mxu0 0.0
    %424 = vmatprep.subr.mxu0 0.0
    %425 = vmatpush1.xpose.msra.mxu0 0.0
    %426 = vmatprep.subr.mxu0 0.0
    %427 = vmatpush1.xpose.msra.mxu0 0.0
    %428 = vmatprep.subr.mxu0 0.0
    %429 = vmatpush1.xpose.msra.mxu0 0.0
    %430 = vmatprep.subr.mxu0 0.0
    %431 = vmatpush1.xpose.msra.mxu0 0.0
    %432 = vmatprep.subr.mxu0 0.0
    %433 = vmatpush1.xpose.msra.mxu0 %v400
    %434 = vmatprep.subr.mxu0 0.0
    %435 = vmatpush2.xpose.msra.mxu0 0.0
    %436 = vmatprep.subr.mxu0 0.0
    %437 = vmatpush2.xpose.msra.mxu0 0.0
    %438 = vmatprep.subr.mxu0 0.0
    %439 = vmatpush2.xpose.msra.mxu0 0.0
    %440 = vmatprep.subr.mxu0 0.0
    %441 = vmatpush2.xpose.msra.mxu0 0.0
    %442 = vmatprep.subr.mxu0 0.0
    %443 = vmatpush2.xpose.msra.mxu0 0.0
    %444 = vmatprep.subr.mxu0 0.0
    %445 = vmatpush2.xpose.msra.mxu0 0.0
    %446 = vmatprep.subr.mxu0 0.0
    %447 = vmatpush2.xpose.msra.mxu0 0.0
    %448 = vmatprep.subr.mxu0 0.0
    %449 = vmatpush2.xpose.msra.mxu0 0.0
    %450 = vmatprep.subr.mxu0 0.0
    %451 = vmatpush2.xpose.msra.mxu0 0.0
    %452 = vmatprep.subr.mxu0 0.0
    %453 = vmatpush2.xpose.msra.mxu0 0.0
    %454 = vmatprep.subr.mxu0 0.0
    %455 = vmatpush2.xpose.msra.mxu0 0.0
    %456 = vmatprep.subr.mxu0 0.0
    %457 = vmatpush2.xpose.msra.mxu0 0.0
    %458 = vmatprep.subr.mxu0 0.0
    %459 = vmatpush2.xpose.msra.mxu0 0.0
    %460 = vmatprep.subr.mxu0 0.0
    %461 = vmatpush2.xpose.msra.mxu0 0.0
    %462 = vmatprep.subr.mxu0 0.0
    %463 = vmatpush2.xpose.msra.mxu0 0.0
    %464 = vmatprep.subr.mxu0 0.0
    %465 = vmatpush2.xpose.msra.mxu0 0.0
    %466 = vmatprep.mubr.f32.mxu0 0.0
    %467 = vmatmul.mubr.f32.gmra.mxu0 %v398
    %v468 = vpop.f32.mrf.mxu0
    %v469 = vadd.f32 0.0, %v468
    %v470 = vpop.f32.mrf.mxu0
    %471 = vdwg.mxu0
    %v472 = vmul.f32 %v469, 0.35355338
    %474 = vrot.lane.b32.xlu0 %v154, 96
    %v475 = vpop.permute.xlu0 %474
    %v476 = vsel %vm160, %v154, 0
    %v478 = vsel %vm160, %v475, 0
    %480 = vmatprep.subr.mxu0 0.0
    %481 = vmatpush1.xpose.msra.mxu0 0.0
    %482 = vmatprep.subr.mxu0 0.0
    %483 = vmatpush1.xpose.msra.mxu0 0.0
    %484 = vmatprep.subr.mxu0 0.0
    %485 = vmatpush1.xpose.msra.mxu0 0.0
    %486 = vmatprep.subr.mxu0 0.0
    %487 = vmatpush1.xpose.msra.mxu0 0.0
    %488 = vmatprep.subr.mxu0 0.0
    %489 = vmatpush1.xpose.msra.mxu0 0.0
    %490 = vmatprep.subr.mxu0 0.0
    %491 = vmatpush1.xpose.msra.mxu0 0.0
    %492 = vmatprep.subr.mxu0 0.0
    %493 = vmatpush1.xpose.msra.mxu0 0.0
    %494 = vmatprep.subr.mxu0 0.0
    %495 = vmatpush1.xpose.msra.mxu0 0.0
    %496 = vmatprep.subr.mxu0 0.0
    %497 = vmatpush1.xpose.msra.mxu0 0.0
    %498 = vmatprep.subr.mxu0 0.0
    %499 = vmatpush1.xpose.msra.mxu0 0.0
    %500 = vmatprep.subr.mxu0 0.0
    %501 = vmatpush1.xpose.msra.mxu0 0.0
    %502 = vmatprep.subr.mxu0 0.0
    %503 = vmatpush1.xpose.msra.mxu0 0.0
    %504 = vmatprep.subr.mxu0 0.0
    %505 = vmatpush1.xpose.msra.mxu0 0.0
    %506 = vmatprep.subr.mxu0 0.0
    %507 = vmatpush1.xpose.msra.mxu0 0.0
    %508 = vmatprep.subr.mxu0 0.0
    %509 = vmatpush1.xpose.msra.mxu0 0.0
    %510 = vmatprep.subr.mxu0 0.0
    %511 = vmatpush1.xpose.msra.mxu0 %v478
    %512 = vmatprep.subr.mxu0 0.0
    %513 = vmatpush2.xpose.msra.mxu0 0.0
    %514 = vmatprep.subr.mxu0 0.0
    %515 = vmatpush2.xpose.msra.mxu0 0.0
    %516 = vmatprep.subr.mxu0 0.0
    %517 = vmatpush2.xpose.msra.mxu0 0.0
    %518 = vmatprep.subr.mxu0 0.0
    %519 = vmatpush2.xpose.msra.mxu0 0.0
    %520 = vmatprep.subr.mxu0 0.0
    %521 = vmatpush2.xpose.msra.mxu0 0.0
    %522 = vmatprep.subr.mxu0 0.0
    %523 = vmatpush2.xpose.msra.mxu0 0.0
    %524 = vmatprep.subr.mxu0 0.0
    %525 = vmatpush2.xpose.msra.mxu0 0.0
    %526 = vmatprep.subr.mxu0 0.0
    %527 = vmatpush2.xpose.msra.mxu0 0.0
    %528 = vmatprep.subr.mxu0 0.0
    %529 = vmatpush2.xpose.msra.mxu0 0.0
    %530 = vmatprep.subr.mxu0 0.0
    %531 = vmatpush2.xpose.msra.mxu0 0.0
    %532 = vmatprep.subr.mxu0 0.0
    %533 = vmatpush2.xpose.msra.mxu0 0.0
    %534 = vmatprep.subr.mxu0 0.0
    %535 = vmatpush2.xpose.msra.mxu0 0.0
    %536 = vmatprep.subr.mxu0 0.0
    %537 = vmatpush2.xpose.msra.mxu0 0.0
    %538 = vmatprep.subr.mxu0 0.0
    %539 = vmatpush2.xpose.msra.mxu0 0.0
    %540 = vmatprep.subr.mxu0 0.0
    %541 = vmatpush2.xpose.msra.mxu0 0.0
    %542 = vmatprep.subr.mxu0 0.0
    %543 = vmatpush2.xpose.msra.mxu0 0.0
    %544 = vmatprep.mubr.f32.mxu0 0.0
    %545 = vmatmul.mubr.f32.gmra.mxu0 %v476
    %v546 = vpop.f32.mrf.mxu0
    %v547 = vadd.f32 0.0, %v546
    %v548 = vpop.f32.mrf.mxu0
    %549 = vdwg.mxu0
    %v550 = vmul.f32 %v547, 0.35355338
    %551 = vrot.lane.b32.xlu0 %v154, 120
    %v552 = vpop.permute.xlu0 %551
    %553 = vrot.lane.b32.xlu0 %v154, 88
    %v554 = vpop.permute.xlu0 %553
    %v555 = vsel %vm160, %v552, 0
    %v557 = vsel %vm160, %v554, 0
    %559 = vmatprep.subr.mxu0 0.0
    %560 = vmatpush1.xpose.msra.mxu0 0.0
    %561 = vmatprep.subr.mxu0 0.0
    %562 = vmatpush1.xpose.msra.mxu0 0.0
    %563 = vmatprep.subr.mxu0 0.0
    %564 = vmatpush1.xpose.msra.mxu0 0.0
    %565 = vmatprep.subr.mxu0 0.0
    %566 = vmatpush1.xpose.msra.mxu0 0.0
    %567 = vmatprep.subr.mxu0 0.0
    %568 = vmatpush1.xpose.msra.mxu0 0.0
    %569 = vmatprep.subr.mxu0 0.0
    %570 = vmatpush1.xpose.msra.mxu0 0.0
    %571 = vmatprep.subr.mxu0 0.0
    %572 = vmatpush1.xpose.msra.mxu0 0.0
    %573 = vmatprep.subr.mxu0 0.0
    %574 = vmatpush1.xpose.msra.mxu0 0.0
    %575 = vmatprep.subr.mxu0 0.0
    %576 = vmatpush1.xpose.msra.mxu0 0.0
    %577 = vmatprep.subr.mxu0 0.0
    %578 = vmatpush1.xpose.msra.mxu0 0.0
    %579 = vmatprep.subr.mxu0 0.0
    %580 = vmatpush1.xpose.msra.mxu0 0.0
    %581 = vmatprep.subr.mxu0 0.0
    %582 = vmatpush1.xpose.msra.mxu0 0.0
    %583 = vmatprep.subr.mxu0 0.0
    %584 = vmatpush1.xpose.msra.mxu0 0.0
    %585 = vmatprep.subr.mxu0 0.0
    %586 = vmatpush1.xpose.msra.mxu0 0.0
    %587 = vmatprep.subr.mxu0 0.0
    %588 = vmatpush1.xpose.msra.mxu0 0.0
    %589 = vmatprep.subr.mxu0 0.0
    %590 = vmatpush1.xpose.msra.mxu0 %v557
    %591 = vmatprep.subr.mxu0 0.0
    %592 = vmatpush2.xpose.msra.mxu0 0.0
    %593 = vmatprep.subr.mxu0 0.0
    %594 = vmatpush2.xpose.msra.mxu0 0.0
    %595 = vmatprep.subr.mxu0 0.0
    %596 = vmatpush2.xpose.msra.mxu0 0.0
    %597 = vmatprep.subr.mxu0 0.0
    %598 = vmatpush2.xpose.msra.mxu0 0.0
    %599 = vmatprep.subr.mxu0 0.0
    %600 = vmatpush2.xpose.msra.mxu0 0.0
    %601 = vmatprep.subr.mxu0 0.0
    %602 = vmatpush2.xpose.msra.mxu0 0.0
    %603 = vmatprep.subr.mxu0 0.0
    %604 = vmatpush2.xpose.msra.mxu0 0.0
    %605 = vmatprep.subr.mxu0 0.0
    %606 = vmatpush2.xpose.msra.mxu0 0.0
    %607 = vmatprep.subr.mxu0 0.0
    %608 = vmatpush2.xpose.msra.mxu0 0.0
    %609 = vmatprep.subr.mxu0 0.0
    %610 = vmatpush2.xpose.msra.mxu0 0.0
    %611 = vmatprep.subr.mxu0 0.0
    %612 = vmatpush2.xpose.msra.mxu0 0.0
    %613 = vmatprep.subr.mxu0 0.0
    %614 = vmatpush2.xpose.msra.mxu0 0.0
    %615 = vmatprep.subr.mxu0 0.0
    %616 = vmatpush2.xpose.msra.mxu0 0.0
    %617 = vmatprep.subr.mxu0 0.0
    %618 = vmatpush2.xpose.msra.mxu0 0.0
    %619 = vmatprep.subr.mxu0 0.0
    %620 = vmatpush2.xpose.msra.mxu0 0.0
    %621 = vmatprep.subr.mxu0 0.0
    %622 = vmatpush2.xpose.msra.mxu0 0.0
    %623 = vmatprep.mubr.f32.mxu0 0.0
    %624 = vmatmul.mubr.f32.gmra.mxu0 %v555
    %v625 = vpop.f32.mrf.mxu0
    %v626 = vadd.f32 0.0, %v625
    %v627 = vpop.f32.mrf.mxu0
    %628 = vdwg.mxu0
    %v629 = vmul.f32 %v626, 0.35355338
    %630 = vrot.lane.b32.xlu0 %v154, 112
    %v631 = vpop.permute.xlu0 %630
    %632 = vrot.lane.b32.xlu0 %v154, 80
    %v633 = vpop.permute.xlu0 %632
    %v634 = vsel %vm160, %v631, 0
    %v636 = vsel %vm160, %v633, 0
    %638 = vmatprep.subr.mxu0 0.0
    %639 = vmatpush1.xpose.msra.mxu0 0.0
    %640 = vmatprep.subr.mxu0 0.0
    %641 = vmatpush1.xpose.msra.mxu0 0.0
    %642 = vmatprep.subr.mxu0 0.0
    %643 = vmatpush1.xpose.msra.mxu0 0.0
    %644 = vmatprep.subr.mxu0 0.0
    %645 = vmatpush1.xpose.msra.mxu0 0.0
    %646 = vmatprep.subr.mxu0 0.0
    %647 = vmatpush1.xpose.msra.mxu0 0.0
    %648 = vmatprep.subr.mxu0 0.0
    %649 = vmatpush1.xpose.msra.mxu0 0.0
    %650 = vmatprep.subr.mxu0 0.0
    %651 = vmatpush1.xpose.msra.mxu0 0.0
    %652 = vmatprep.subr.mxu0 0.0
    %653 = vmatpush1.xpose.msra.mxu0 0.0
    %654 = vmatprep.subr.mxu0 0.0
    %655 = vmatpush1.xpose.msra.mxu0 0.0
    %656 = vmatprep.subr.mxu0 0.0
    %657 = vmatpush1.xpose.msra.mxu0 0.0
    %658 = vmatprep.subr.mxu0 0.0
    %659 = vmatpush1.xpose.msra.mxu0 0.0
    %660 = vmatprep.subr.mxu0 0.0
    %661 = vmatpush1.xpose.msra.mxu0 0.0
    %662 = vmatprep.subr.mxu0 0.0
    %663 = vmatpush1.xpose.msra.mxu0 0.0
    %664 = vmatprep.subr.mxu0 0.0
    %665 = vmatpush1.xpose.msra.mxu0 0.0
    %666 = vmatprep.subr.mxu0 0.0
    %667 = vmatpush1.xpose.msra.mxu0 0.0
    %668 = vmatprep.subr.mxu0 0.0
    %669 = vmatpush1.xpose.msra.mxu0 %v636
    %670 = vmatprep.subr.mxu0 0.0
    %671 = vmatpush2.xpose.msra.mxu0 0.0
    %672 = vmatprep.subr.mxu0 0.0
    %673 = vmatpush2.xpose.msra.mxu0 0.0
    %674 = vmatprep.subr.mxu0 0.0
    %675 = vmatpush2.xpose.msra.mxu0 0.0
    %676 = vmatprep.subr.mxu0 0.0
    %677 = vmatpush2.xpose.msra.mxu0 0.0
    %678 = vmatprep.subr.mxu0 0.0
    %679 = vmatpush2.xpose.msra.mxu0 0.0
    %680 = vmatprep.subr.mxu0 0.0
    %681 = vmatpush2.xpose.msra.mxu0 0.0
    %682 = vmatprep.subr.mxu0 0.0
    %683 = vmatpush2.xpose.msra.mxu0 0.0
    %684 = vmatprep.subr.mxu0 0.0
    %685 = vmatpush2.xpose.msra.mxu0 0.0
    %686 = vmatprep.subr.mxu0 0.0
    %687 = vmatpush2.xpose.msra.mxu0 0.0
    %688 = vmatprep.subr.mxu0 0.0
    %689 = vmatpush2.xpose.msra.mxu0 0.0
    %690 = vmatprep.subr.mxu0 0.0
    %691 = vmatpush2.xpose.msra.mxu0 0.0
    %692 = vmatprep.subr.mxu0 0.0
    %693 = vmatpush2.xpose.msra.mxu0 0.0
    %694 = vmatprep.subr.mxu0 0.0
    %695 = vmatpush2.xpose.msra.mxu0 0.0
    %696 = vmatprep.subr.mxu0 0.0
    %697 = vmatpush2.xpose.msra.mxu0 0.0
    %698 = vmatprep.subr.mxu0 0.0
    %699 = vmatpush2.xpose.msra.mxu0 0.0
    %700 = vmatprep.subr.mxu0 0.0
    %701 = vmatpush2.xpose.msra.mxu0 0.0
    %702 = vmatprep.mubr.f32.mxu0 0.0
    %703 = vmatmul.mubr.f32.gmra.mxu0 %v634
    %v704 = vpop.f32.mrf.mxu0
    %v705 = vadd.f32 0.0, %v704
    %v706 = vpop.f32.mrf.mxu0
    %707 = vdwg.mxu0
    %v708 = vmul.f32 %v705, 0.35355338
    %709 = vrot.lane.b32.xlu0 %v154, 104
    %v710 = vpop.permute.xlu0 %709
    %711 = vrot.lane.b32.xlu0 %v154, 72
    %v712 = vpop.permute.xlu0 %711
    %v713 = vsel %vm160, %v710, 0
    %v715 = vsel %vm160, %v712, 0
    %717 = vmatprep.subr.mxu0 0.0
    %718 = vmatpush1.xpose.msra.mxu0 0.0
    %719 = vmatprep.subr.mxu0 0.0
    %720 = vmatpush1.xpose.msra.mxu0 0.0
    %721 = vmatprep.subr.mxu0 0.0
    %722 = vmatpush1.xpose.msra.mxu0 0.0
    %723 = vmatprep.subr.mxu0 0.0
    %724 = vmatpush1.xpose.msra.mxu0 0.0
    %725 = vmatprep.subr.mxu0 0.0
    %726 = vmatpush1.xpose.msra.mxu0 0.0
    %727 = vmatprep.subr.mxu0 0.0
    %728 = vmatpush1.xpose.msra.mxu0 0.0
    %729 = vmatprep.subr.mxu0 0.0
    %730 = vmatpush1.xpose.msra.mxu0 0.0
    %731 = vmatprep.subr.mxu0 0.0
    %732 = vmatpush1.xpose.msra.mxu0 0.0
    %733 = vmatprep.subr.mxu0 0.0
    %734 = vmatpush1.xpose.msra.mxu0 0.0
    %735 = vmatprep.subr.mxu0 0.0
    %736 = vmatpush1.xpose.msra.mxu0 0.0
    %737 = vmatprep.subr.mxu0 0.0
    %738 = vmatpush1.xpose.msra.mxu0 0.0
    %739 = vmatprep.subr.mxu0 0.0
    %740 = vmatpush1.xpose.msra.mxu0 0.0
    %741 = vmatprep.subr.mxu0 0.0
    %742 = vmatpush1.xpose.msra.mxu0 0.0
    %743 = vmatprep.subr.mxu0 0.0
    %744 = vmatpush1.xpose.msra.mxu0 0.0
    %745 = vmatprep.subr.mxu0 0.0
    %746 = vmatpush1.xpose.msra.mxu0 0.0
    %747 = vmatprep.subr.mxu0 0.0
    %748 = vmatpush1.xpose.msra.mxu0 %v715
    %749 = vmatprep.subr.mxu0 0.0
    %750 = vmatpush2.xpose.msra.mxu0 0.0
    %751 = vmatprep.subr.mxu0 0.0
    %752 = vmatpush2.xpose.msra.mxu0 0.0
    %753 = vmatprep.subr.mxu0 0.0
    %754 = vmatpush2.xpose.msra.mxu0 0.0
    %755 = vmatprep.subr.mxu0 0.0
    %756 = vmatpush2.xpose.msra.mxu0 0.0
    %757 = vmatprep.subr.mxu0 0.0
    %758 = vmatpush2.xpose.msra.mxu0 0.0
    %759 = vmatprep.subr.mxu0 0.0
    %760 = vmatpush2.xpose.msra.mxu0 0.0
    %761 = vmatprep.subr.mxu0 0.0
    %762 = vmatpush2.xpose.msra.mxu0 0.0
    %763 = vmatprep.subr.mxu0 0.0
    %764 = vmatpush2.xpose.msra.mxu0 0.0
    %765 = vmatprep.subr.mxu0 0.0
    %766 = vmatpush2.xpose.msra.mxu0 0.0
    %767 = vmatprep.subr.mxu0 0.0
    %768 = vmatpush2.xpose.msra.mxu0 0.0
    %769 = vmatprep.subr.mxu0 0.0
    %770 = vmatpush2.xpose.msra.mxu0 0.0
    %771 = vmatprep.subr.mxu0 0.0
    %772 = vmatpush2.xpose.msra.mxu0 0.0
    %773 = vmatprep.subr.mxu0 0.0
    %774 = vmatpush2.xpose.msra.mxu0 0.0
    %775 = vmatprep.subr.mxu0 0.0
    %776 = vmatpush2.xpose.msra.mxu0 0.0
    %777 = vmatprep.subr.mxu0 0.0
    %778 = vmatpush2.xpose.msra.mxu0 0.0
    %779 = vmatprep.subr.mxu0 0.0
    %780 = vmatpush2.xpose.msra.mxu0 0.0
    %781 = vmatprep.mubr.f32.mxu0 0.0
    %782 = vmatmul.mubr.f32.gmra.mxu0 %v713
    %v783 = vpop.f32.mrf.mxu0
    %v784 = vadd.f32 0.0, %v783
    %v785 = vpop.f32.mrf.mxu0
    %786 = vdwg.mxu0
    %v787 = vmul.f32 %v784, 0.35355338
    %v788 = vsel %vm160, %v235, -inf
    %789 = vmax.xlane.f32.xlu0 %v788
    %v790 = vpop.xlane.xlu0 %789
    %v791 = vsel %vm160, %v314, -inf
    %792 = vmax.xlane.f32.xlu0 %v791
    %v793 = vpop.xlane.xlu0 %792
    %v794 = vsel %vm160, %v393, -inf
    %795 = vmax.xlane.f32.xlu0 %v794
    %v796 = vpop.xlane.xlu0 %795
    %v797 = vsel %vm160, %v472, -inf
    %798 = vmax.xlane.f32.xlu0 %v797
    %v799 = vpop.xlane.xlu0 %798
    %v800 = vsel %vm160, %v550, -inf
    %801 = vmax.xlane.f32.xlu0 %v800
    %v802 = vpop.xlane.xlu0 %801
    %v803 = vsel %vm160, %v629, -inf
    %804 = vmax.xlane.f32.xlu0 %v803
    %v805 = vpop.xlane.xlu0 %804
    %v806 = vsel %vm160, %v708, -inf
    %807 = vmax.xlane.f32.xlu0 %v806
    %v808 = vpop.xlane.xlu0 %807
    %v809 = vsel %vm160, %v787, -inf
    %810 = vmax.xlane.f32.xlu0 %v809
    %v811 = vpop.xlane.xlu0 %810
    %v812 = vsub.f32 %v235, %v790
    %v813 = vsub.f32 %v314, %v793
    %v814 = vsub.f32 %v393, %v796
    %v815 = vsub.f32 %v472, %v799
    %v816 = vsub.f32 %v550, %v802
    %v817 = vsub.f32 %v629, %v805
    %v818 = vsub.f32 %v708, %v808
    %v819 = vsub.f32 %v787, %v811
    %v820 = vmul.f32 %v812, 1.442695
    %v821 = vpow.pop %v820
    %v822 = vmul.f32 %v813, 1.442695
    %v823 = vpow.pop %v822
    %v824 = vmul.f32 %v814, 1.442695
    %v825 = vpow.pop %v824
    %v826 = vmul.f32 %v815, 1.442695
    %v827 = vpow.pop %v826
    %v828 = vmul.f32 %v816, 1.442695
    %v829 = vpow.pop %v828
    %v830 = vmul.f32 %v817, 1.442695
    %v831 = vpow.pop %v830
    %v832 = vmul.f32 %v818, 1.442695
    %v833 = vpow.pop %v832
    %v834 = vmul.f32 %v819, 1.442695
    %v835 = vpow.pop %v834
    %v836 = vsel %vm160, %v821, 0.0
    %837 = vadd.xlane.f32.xlu0 %v836
    %v838 = vpop.xlane.xlu0 %837
    %v839 = vsel %vm160, %v823, 0.0
    %840 = vadd.xlane.f32.xlu0 %v839
    %v841 = vpop.xlane.xlu0 %840
    %v842 = vsel %vm160, %v825, 0.0
    %843 = vadd.xlane.f32.xlu0 %v842
    %v844 = vpop.xlane.xlu0 %843
    %v845 = vsel %vm160, %v827, 0.0
    %846 = vadd.xlane.f32.xlu0 %v845
    %v847 = vpop.xlane.xlu0 %846
    %v848 = vsel %vm160, %v829, 0.0
    %849 = vadd.xlane.f32.xlu0 %v848
    %v850 = vpop.xlane.xlu0 %849
    %v851 = vsel %vm160, %v831, 0.0
    %852 = vadd.xlane.f32.xlu0 %v851
    %v853 = vpop.xlane.xlu0 %852
    %v854 = vsel %vm160, %v833, 0.0
    %855 = vadd.xlane.f32.xlu0 %v854
    %v856 = vpop.xlane.xlu0 %855
    %v857 = vsel %vm160, %v835, 0.0
    %858 = vadd.xlane.f32.xlu0 %v857
    %v859 = vpop.xlane.xlu0 %858
    %v860 = vrcp.pop %v838
    %v861 = vmul.f32 %v821, %v860
    %v862 = vrcp.pop %v841
    %v863 = vmul.f32 %v823, %v862
    %v864 = vrcp.pop %v844
    %v865 = vmul.f32 %v825, %v864
    %v866 = vrcp.pop %v847
    %v867 = vmul.f32 %v827, %v866
    %v868 = vrcp.pop %v850
    %v869 = vmul.f32 %v829, %v868
    %v870 = vrcp.pop %v853
    %v871 = vmul.f32 %v831, %v870
    %v872 = vrcp.pop %v856
    %v873 = vmul.f32 %v833, %v872
    %v874 = vrcp.pop %v859
    %v875 = vmul.f32 %v835, %v874
    %876 = vrot.lane.b32.xlu0 %v149, 64
    %v877 = vpop.permute.xlu0 %876
    %v880 = vsel %vm160, %v861, 0
    %882 = vmatprep.subr.mxu0 0.0
    %883 = vmatpush1.msra.mxu0 0.0
    %884 = vmatprep.subr.mxu0 0.0
    %885 = vmatpush1.msra.mxu0 0.0
    %886 = vmatprep.subr.mxu0 0.0
    %887 = vmatpush1.msra.mxu0 0.0
    %888 = vmatprep.subr.mxu0 0.0
    %889 = vmatpush1.msra.mxu0 0.0
    %890 = vmatprep.subr.mxu0 0.0
    %891 = vmatpush1.msra.mxu0 0.0
    %892 = vmatprep.subr.mxu0 0.0
    %893 = vmatpush1.msra.mxu0 0.0
    %894 = vmatprep.subr.mxu0 0.0
    %895 = vmatpush1.msra.mxu0 0.0
    %896 = vmatprep.subr.mxu0 0.0
    %897 = vmatpush1.msra.mxu0 0.0
    %898 = vmatprep.subr.mxu0 0.0
    %899 = vmatpush1.msra.mxu0 0.0
    %900 = vmatprep.subr.mxu0 0.0
    %901 = vmatpush1.msra.mxu0 0.0
    %902 = vmatprep.subr.mxu0 0.0
    %903 = vmatpush1.msra.mxu0 0.0
    %904 = vmatprep.subr.mxu0 0.0
    %905 = vmatpush1.msra.mxu0 0.0
    %906 = vmatprep.subr.mxu0 0.0
    %907 = vmatpush1.msra.mxu0 0.0
    %908 = vmatprep.subr.mxu0 0.0
    %909 = vmatpush1.msra.mxu0 0.0
    %910 = vmatprep.subr.mxu0 0.0
    %911 = vmatpush1.msra.mxu0 0.0
    %912 = vmatprep.subr.mxu0 0.0
    %913 = vmatpush1.msra.mxu0 %v877
    %914 = vmatprep.subr.mxu0 0.0
    %915 = vmatpush2.msra.mxu0 0.0
    %916 = vmatprep.subr.mxu0 0.0
    %917 = vmatpush2.msra.mxu0 0.0
    %918 = vmatprep.subr.mxu0 0.0
    %919 = vmatpush2.msra.mxu0 0.0
    %920 = vmatprep.subr.mxu0 0.0
    %921 = vmatpush2.msra.mxu0 0.0
    %922 = vmatprep.subr.mxu0 0.0
    %923 = vmatpush2.msra.mxu0 0.0
    %924 = vmatprep.subr.mxu0 0.0
    %925 = vmatpush2.msra.mxu0 0.0
    %926 = vmatprep.subr.mxu0 0.0
    %927 = vmatpush2.msra.mxu0 0.0
    %928 = vmatprep.subr.mxu0 0.0
    %929 = vmatpush2.msra.mxu0 0.0
    %930 = vmatprep.subr.mxu0 0.0
    %931 = vmatpush2.msra.mxu0 0.0
    %932 = vmatprep.subr.mxu0 0.0
    %933 = vmatpush2.msra.mxu0 0.0
    %934 = vmatprep.subr.mxu0 0.0
    %935 = vmatpush2.msra.mxu0 0.0
    %936 = vmatprep.subr.mxu0 0.0
    %937 = vmatpush2.msra.mxu0 0.0
    %938 = vmatprep.subr.mxu0 0.0
    %939 = vmatpush2.msra.mxu0 0.0
    %940 = vmatprep.subr.mxu0 0.0
    %941 = vmatpush2.msra.mxu0 0.0
    %942 = vmatprep.subr.mxu0 0.0
    %943 = vmatpush2.msra.mxu0 0.0
    %944 = vmatprep.subr.mxu0 0.0
    %945 = vmatpush2.msra.mxu0 0.0
    %946 = vmatprep.mubr.f32.mxu0 0.0
    %947 = vmatmul.mubr.f32.gmra.mxu0 %v880
    %v948 = vpop.f32.mrf.mxu0
    %v949 = vadd.f32 0.0, %v948
    %v950 = vpop.f32.mrf.mxu0
    %951 = vdwg.mxu0
    %952 = vrot.lane.b32.xlu0 %v149, 56
    %v953 = vpop.permute.xlu0 %952
    %v956 = vsel %vm160, %v863, 0
    %958 = vmatprep.subr.mxu0 0.0
    %959 = vmatpush1.msra.mxu0 0.0
    %960 = vmatprep.subr.mxu0 0.0
    %961 = vmatpush1.msra.mxu0 0.0
    %962 = vmatprep.subr.mxu0 0.0
    %963 = vmatpush1.msra.mxu0 0.0
    %964 = vmatprep.subr.mxu0 0.0
    %965 = vmatpush1.msra.mxu0 0.0
    %966 = vmatprep.subr.mxu0 0.0
    %967 = vmatpush1.msra.mxu0 0.0
    %968 = vmatprep.subr.mxu0 0.0
    %969 = vmatpush1.msra.mxu0 0.0
    %970 = vmatprep.subr.mxu0 0.0
    %971 = vmatpush1.msra.mxu0 0.0
    %972 = vmatprep.subr.mxu0 0.0
    %973 = vmatpush1.msra.mxu0 0.0
    %974 = vmatprep.subr.mxu0 0.0
    %975 = vmatpush1.msra.mxu0 0.0
    %976 = vmatprep.subr.mxu0 0.0
    %977 = vmatpush1.msra.mxu0 0.0
    %978 = vmatprep.subr.mxu0 0.0
    %979 = vmatpush1.msra.mxu0 0.0
    %980 = vmatprep.subr.mxu0 0.0
    %981 = vmatpush1.msra.mxu0 0.0
    %982 = vmatprep.subr.mxu0 0.0
    %983 = vmatpush1.msra.mxu0 0.0
    %984 = vmatprep.subr.mxu0 0.0
    %985 = vmatpush1.msra.mxu0 0.0
    %986 = vmatprep.subr.mxu0 0.0
    %987 = vmatpush1.msra.mxu0 0.0
    %988 = vmatprep.subr.mxu0 0.0
    %989 = vmatpush1.msra.mxu0 %v953
    %990 = vmatprep.subr.mxu0 0.0
    %991 = vmatpush2.msra.mxu0 0.0
    %992 = vmatprep.subr.mxu0 0.0
    %993 = vmatpush2.msra.mxu0 0.0
    %994 = vmatprep.subr.mxu0 0.0
    %995 = vmatpush2.msra.mxu0 0.0
    %996 = vmatprep.subr.mxu0 0.0
    %997 = vmatpush2.msra.mxu0 0.0
    %998 = vmatprep.subr.mxu0 0.0
    %999 = vmatpush2.msra.mxu0 0.0
    %1000 = vmatprep.subr.mxu0 0.0
    %1001 = vmatpush2.msra.mxu0 0.0
    %1002 = vmatprep.subr.mxu0 0.0
    %1003 = vmatpush2.msra.mxu0 0.0
    %1004 = vmatprep.subr.mxu0 0.0
    %1005 = vmatpush2.msra.mxu0 0.0
    %1006 = vmatprep.subr.mxu0 0.0
    %1007 = vmatpush2.msra.mxu0 0.0
    %1008 = vmatprep.subr.mxu0 0.0
    %1009 = vmatpush2.msra.mxu0 0.0
    %1010 = vmatprep.subr.mxu0 0.0
    %1011 = vmatpush2.msra.mxu0 0.0
    %1012 = vmatprep.subr.mxu0 0.0
    %1013 = vmatpush2.msra.mxu0 0.0
    %1014 = vmatprep.subr.mxu0 0.0
    %1015 = vmatpush2.msra.mxu0 0.0
    %1016 = vmatprep.subr.mxu0 0.0
    %1017 = vmatpush2.msra.mxu0 0.0
    %1018 = vmatprep.subr.mxu0 0.0
    %1019 = vmatpush2.msra.mxu0 0.0
    %1020 = vmatprep.subr.mxu0 0.0
    %1021 = vmatpush2.msra.mxu0 0.0
    %1022 = vmatprep.mubr.f32.mxu0 0.0
    %1023 = vmatmul.mubr.f32.gmra.mxu0 %v956
    %v1024 = vpop.f32.mrf.mxu0
    %v1025 = vadd.f32 0.0, %v1024
    %v1026 = vpop.f32.mrf.mxu0
    %1027 = vdwg.mxu0
    %1028 = vrot.lane.b32.xlu0 %v149, 48
    %v1029 = vpop.permute.xlu0 %1028
    %v1032 = vsel %vm160, %v865, 0
    %1034 = vmatprep.subr.mxu0 0.0
    %1035 = vmatpush1.msra.mxu0 0.0
    %1036 = vmatprep.subr.mxu0 0.0
    %1037 = vmatpush1.msra.mxu0 0.0
    %1038 = vmatprep.subr.mxu0 0.0
    %1039 = vmatpush1.msra.mxu0 0.0
    %1040 = vmatprep.subr.mxu0 0.0
    %1041 = vmatpush1.msra.mxu0 0.0
    %1042 = vmatprep.subr.mxu0 0.0
    %1043 = vmatpush1.msra.mxu0 0.0
    %1044 = vmatprep.subr.mxu0 0.0
    %1045 = vmatpush1.msra.mxu0 0.0
    %1046 = vmatprep.subr.mxu0 0.0
    %1047 = vmatpush1.msra.mxu0 0.0
    %1048 = vmatprep.subr.mxu0 0.0
    %1049 = vmatpush1.msra.mxu0 0.0
    %1050 = vmatprep.subr.mxu0 0.0
    %1051 = vmatpush1.msra.mxu0 0.0
    %1052 = vmatprep.subr.mxu0 0.0
    %1053 = vmatpush1.msra.mxu0 0.0
    %1054 = vmatprep.subr.mxu0 0.0
    %1055 = vmatpush1.msra.mxu0 0.0
    %1056 = vmatprep.subr.mxu0 0.0
    %1057 = vmatpush1.msra.mxu0 0.0
    %1058 = vmatprep.subr.mxu0 0.0
    %1059 = vmatpush1.msra.mxu0 0.0
    %1060 = vmatprep.subr.mxu0 0.0
    %1061 = vmatpush1.msra.mxu0 0.0
    %1062 = vmatprep.subr.mxu0 0.0
    %1063 = vmatpush1.msra.mxu0 0.0
    %1064 = vmatprep.subr.mxu0 0.0
    %1065 = vmatpush1.msra.mxu0 %v1029
    %1066 = vmatprep.subr.mxu0 0.0
    %1067 = vmatpush2.msra.mxu0 0.0
    %1068 = vmatprep.subr.mxu0 0.0
    %1069 = vmatpush2.msra.mxu0 0.0
    %1070 = vmatprep.subr.mxu0 0.0
    %1071 = vmatpush2.msra.mxu0 0.0
    %1072 = vmatprep.subr.mxu0 0.0
    %1073 = vmatpush2.msra.mxu0 0.0
    %1074 = vmatprep.subr.mxu0 0.0
    %1075 = vmatpush2.msra.mxu0 0.0
    %1076 = vmatprep.subr.mxu0 0.0
    %1077 = vmatpush2.msra.mxu0 0.0
    %1078 = vmatprep.subr.mxu0 0.0
    %1079 = vmatpush2.msra.mxu0 0.0
    %1080 = vmatprep.subr.mxu0 0.0
    %1081 = vmatpush2.msra.mxu0 0.0
    %1082 = vmatprep.subr.mxu0 0.0
    %1083 = vmatpush2.msra.mxu0 0.0
    %1084 = vmatprep.subr.mxu0 0.0
    %1085 = vmatpush2.msra.mxu0 0.0
    %1086 = vmatprep.subr.mxu0 0.0
    %1087 = vmatpush2.msra.mxu0 0.0
    %1088 = vmatprep.subr.mxu0 0.0
    %1089 = vmatpush2.msra.mxu0 0.0
    %1090 = vmatprep.subr.mxu0 0.0
    %1091 = vmatpush2.msra.mxu0 0.0
    %1092 = vmatprep.subr.mxu0 0.0
    %1093 = vmatpush2.msra.mxu0 0.0
    %1094 = vmatprep.subr.mxu0 0.0
    %1095 = vmatpush2.msra.mxu0 0.0
    %1096 = vmatprep.subr.mxu0 0.0
    %1097 = vmatpush2.msra.mxu0 0.0
    %1098 = vmatprep.mubr.f32.mxu0 0.0
    %1099 = vmatmul.mubr.f32.gmra.mxu0 %v1032
    %v1100 = vpop.f32.mrf.mxu0
    %v1101 = vadd.f32 0.0, %v1100
    %v1102 = vpop.f32.mrf.mxu0
    %1103 = vdwg.mxu0
    %1104 = vrot.lane.b32.xlu0 %v149, 40
    %v1105 = vpop.permute.xlu0 %1104
    %v1108 = vsel %vm160, %v867, 0
    %1110 = vmatprep.subr.mxu0 0.0
    %1111 = vmatpush1.msra.mxu0 0.0
    %1112 = vmatprep.subr.mxu0 0.0
    %1113 = vmatpush1.msra.mxu0 0.0
    %1114 = vmatprep.subr.mxu0 0.0
    %1115 = vmatpush1.msra.mxu0 0.0
    %1116 = vmatprep.subr.mxu0 0.0
    %1117 = vmatpush1.msra.mxu0 0.0
    %1118 = vmatprep.subr.mxu0 0.0
    %1119 = vmatpush1.msra.mxu0 0.0
    %1120 = vmatprep.subr.mxu0 0.0
    %1121 = vmatpush1.msra.mxu0 0.0
    %1122 = vmatprep.subr.mxu0 0.0
    %1123 = vmatpush1.msra.mxu0 0.0
    %1124 = vmatprep.subr.mxu0 0.0
    %1125 = vmatpush1.msra.mxu0 0.0
    %1126 = vmatprep.subr.mxu0 0.0
    %1127 = vmatpush1.msra.mxu0 0.0
    %1128 = vmatprep.subr.mxu0 0.0
    %1129 = vmatpush1.msra.mxu0 0.0
    %1130 = vmatprep.subr.mxu0 0.0
    %1131 = vmatpush1.msra.mxu0 0.0
    %1132 = vmatprep.subr.mxu0 0.0
    %1133 = vmatpush1.msra.mxu0 0.0
    %1134 = vmatprep.subr.mxu0 0.0
    %1135 = vmatpush1.msra.mxu0 0.0
    %1136 = vmatprep.subr.mxu0 0.0
    %1137 = vmatpush1.msra.mxu0 0.0
    %1138 = vmatprep.subr.mxu0 0.0
    %1139 = vmatpush1.msra.mxu0 0.0
    %1140 = vmatprep.subr.mxu0 0.0
    %1141 = vmatpush1.msra.mxu0 %v1105
    %1142 = vmatprep.subr.mxu0 0.0
    %1143 = vmatpush2.msra.mxu0 0.0
    %1144 = vmatprep.subr.mxu0 0.0
    %1145 = vmatpush2.msra.mxu0 0.0
    %1146 = vmatprep.subr.mxu0 0.0
    %1147 = vmatpush2.msra.mxu0 0.0
    %1148 = vmatprep.subr.mxu0 0.0
    %1149 = vmatpush2.msra.mxu0 0.0
    %1150 = vmatprep.subr.mxu0 0.0
    %1151 = vmatpush2.msra.mxu0 0.0
    %1152 = vmatprep.subr.mxu0 0.0
    %1153 = vmatpush2.msra.mxu0 0.0
    %1154 = vmatprep.subr.mxu0 0.0
    %1155 = vmatpush2.msra.mxu0 0.0
    %1156 = vmatprep.subr.mxu0 0.0
    %1157 = vmatpush2.msra.mxu0 0.0
    %1158 = vmatprep.subr.mxu0 0.0
    %1159 = vmatpush2.msra.mxu0 0.0
    %1160 = vmatprep.subr.mxu0 0.0
    %1161 = vmatpush2.msra.mxu0 0.0
    %1162 = vmatprep.subr.mxu0 0.0
    %1163 = vmatpush2.msra.mxu0 0.0
    %1164 = vmatprep.subr.mxu0 0.0
    %1165 = vmatpush2.msra.mxu0 0.0
    %1166 = vmatprep.subr.mxu0 0.0
    %1167 = vmatpush2.msra.mxu0 0.0
    %1168 = vmatprep.subr.mxu0 0.0
    %1169 = vmatpush2.msra.mxu0 0.0
    %1170 = vmatprep.subr.mxu0 0.0
    %1171 = vmatpush2.msra.mxu0 0.0
    %1172 = vmatprep.subr.mxu0 0.0
    %1173 = vmatpush2.msra.mxu0 0.0
    %1174 = vmatprep.mubr.f32.mxu0 0.0
    %1175 = vmatmul.mubr.f32.gmra.mxu0 %v1108
    %v1176 = vpop.f32.mrf.mxu0
    %v1177 = vadd.f32 0.0, %v1176
    %v1178 = vpop.f32.mrf.mxu0
    %1179 = vdwg.mxu0
    %1181 = vrot.lane.b32.xlu0 %v1025, 8
    %v1182 = vpop.permute.xlu0 %1181
    %1185 = vrot.lane.b32.xlu0 %v1101, 16
    %v1186 = vpop.permute.xlu0 %1185
    %1189 = vrot.lane.b32.xlu0 %v1177, 24
    %v1190 = vpop.permute.xlu0 %1189
    %v1192 = vsel %vm160, %v949, %v1182
    %vm1193 = vcmask 130048
    %v1194 = vsel %vm1193, %v1192, %v1186
    %vm1195 = vcmask 195584
    %v1196 = vsel %vm1195, %v1194, %v1190
    %1197 = vrot.lane.b32.xlu0 %v154, 64
    %v1198 = vpop.permute.xlu0 %1197
    %v1201 = vsel %vm160, %v869, 0
    %1203 = vmatprep.subr.mxu0 0.0
    %1204 = vmatpush1.msra.mxu0 0.0
    %1205 = vmatprep.subr.mxu0 0.0
    %1206 = vmatpush1.msra.mxu0 0.0
    %1207 = vmatprep.subr.mxu0 0.0
    %1208 = vmatpush1.msra.mxu0 0.0
    %1209 = vmatprep.subr.mxu0 0.0
    %1210 = vmatpush1.msra.mxu0 0.0
    %1211 = vmatprep.subr.mxu0 0.0
    %1212 = vmatpush1.msra.mxu0 0.0
    %1213 = vmatprep.subr.mxu0 0.0
    %1214 = vmatpush1.msra.mxu0 0.0
    %1215 = vmatprep.subr.mxu0 0.0
    %1216 = vmatpush1.msra.mxu0 0.0
    %1217 = vmatprep.subr.mxu0 0.0
    %1218 = vmatpush1.msra.mxu0 0.0
    %1219 = vmatprep.subr.mxu0 0.0
    %1220 = vmatpush1.msra.mxu0 0.0
    %1221 = vmatprep.subr.mxu0 0.0
    %1222 = vmatpush1.msra.mxu0 0.0
    %1223 = vmatprep.subr.mxu0 0.0
    %1224 = vmatpush1.msra.mxu0 0.0
    %1225 = vmatprep.subr.mxu0 0.0
    %1226 = vmatpush1.msra.mxu0 0.0
    %1227 = vmatprep.subr.mxu0 0.0
    %1228 = vmatpush1.msra.mxu0 0.0
    %1229 = vmatprep.subr.mxu0 0.0
    %1230 = vmatpush1.msra.mxu0 0.0
    %1231 = vmatprep.subr.mxu0 0.0
    %1232 = vmatpush1.msra.mxu0 0.0
    %1233 = vmatprep.subr.mxu0 0.0
    %1234 = vmatpush1.msra.mxu0 %v1198
    %1235 = vmatprep.subr.mxu0 0.0
    %1236 = vmatpush2.msra.mxu0 0.0
    %1237 = vmatprep.subr.mxu0 0.0
    %1238 = vmatpush2.msra.mxu0 0.0
    %1239 = vmatprep.subr.mxu0 0.0
    %1240 = vmatpush2.msra.mxu0 0.0
    %1241 = vmatprep.subr.mxu0 0.0
    %1242 = vmatpush2.msra.mxu0 0.0
    %1243 = vmatprep.subr.mxu0 0.0
    %1244 = vmatpush2.msra.mxu0 0.0
    %1245 = vmatprep.subr.mxu0 0.0
    %1246 = vmatpush2.msra.mxu0 0.0
    %1247 = vmatprep.subr.mxu0 0.0
    %1248 = vmatpush2.msra.mxu0 0.0
    %1249 = vmatprep.subr.mxu0 0.0
    %1250 = vmatpush2.msra.mxu0 0.0
    %1251 = vmatprep.subr.mxu0 0.0
    %1252 = vmatpush2.msra.mxu0 0.0
    %1253 = vmatprep.subr.mxu0 0.0
    %1254 = vmatpush2.msra.mxu0 0.0
    %1255 = vmatprep.subr.mxu0 0.0
    %1256 = vmatpush2.msra.mxu0 0.0
    %1257 = vmatprep.subr.mxu0 0.0
    %1258 = vmatpush2.msra.mxu0 0.0
    %1259 = vmatprep.subr.mxu0 0.0
    %1260 = vmatpush2.msra.mxu0 0.0
    %1261 = vmatprep.subr.mxu0 0.0
    %1262 = vmatpush2.msra.mxu0 0.0
    %1263 = vmatprep.subr.mxu0 0.0
    %1264 = vmatpush2.msra.mxu0 0.0
    %1265 = vmatprep.subr.mxu0 0.0
    %1266 = vmatpush2.msra.mxu0 0.0
    %1267 = vmatprep.mubr.f32.mxu0 0.0
    %1268 = vmatmul.mubr.f32.gmra.mxu0 %v1201
    %v1269 = vpop.f32.mrf.mxu0
    %v1270 = vadd.f32 0.0, %v1269
    %v1271 = vpop.f32.mrf.mxu0
    %1272 = vdwg.mxu0
    %1273 = vrot.lane.b32.xlu0 %v154, 56
    %v1274 = vpop.permute.xlu0 %1273
    %v1277 = vsel %vm160, %v871, 0
    %1279 = vmatprep.subr.mxu0 0.0
    %1280 = vmatpush1.msra.mxu0 0.0
    %1281 = vmatprep.subr.mxu0 0.0
    %1282 = vmatpush1.msra.mxu0 0.0
    %1283 = vmatprep.subr.mxu0 0.0
    %1284 = vmatpush1.msra.mxu0 0.0
    %1285 = vmatprep.subr.mxu0 0.0
    %1286 = vmatpush1.msra.mxu0 0.0
    %1287 = vmatprep.subr.mxu0 0.0
    %1288 = vmatpush1.msra.mxu0 0.0
    %1289 = vmatprep.subr.mxu0 0.0
    %1290 = vmatpush1.msra.mxu0 0.0
    %1291 = vmatprep.subr.mxu0 0.0
    %1292 = vmatpush1.msra.mxu0 0.0
    %1293 = vmatprep.subr.mxu0 0.0
    %1294 = vmatpush1.msra.mxu0 0.0
    %1295 = vmatprep.subr.mxu0 0.0
    %1296 = vmatpush1.msra.mxu0 0.0
    %1297 = vmatprep.subr.mxu0 0.0
    %1298 = vmatpush1.msra.mxu0 0.0
    %1299 = vmatprep.subr.mxu0 0.0
    %1300 = vmatpush1.msra.mxu0 0.0
    %1301 = vmatprep.subr.mxu0 0.0
    %1302 = vmatpush1.msra.mxu0 0.0
    %1303 = vmatprep.subr.mxu0 0.0
    %1304 = vmatpush1.msra.mxu0 0.0
    %1305 = vmatprep.subr.mxu0 0.0
    %1306 = vmatpush1.msra.mxu0 0.0
    %1307 = vmatprep.subr.mxu0 0.0
    %1308 = vmatpush1.msra.mxu0 0.0
    %1309 = vmatprep.subr.mxu0 0.0
    %1310 = vmatpush1.msra.mxu0 %v1274
    %1311 = vmatprep.subr.mxu0 0.0
    %1312 = vmatpush2.msra.mxu0 0.0
    %1313 = vmatprep.subr.mxu0 0.0
    %1314 = vmatpush2.msra.mxu0 0.0
    %1315 = vmatprep.subr.mxu0 0.0
    %1316 = vmatpush2.msra.mxu0 0.0
    %1317 = vmatprep.subr.mxu0 0.0
    %1318 = vmatpush2.msra.mxu0 0.0
    %1319 = vmatprep.subr.mxu0 0.0
    %1320 = vmatpush2.msra.mxu0 0.0
    %1321 = vmatprep.subr.mxu0 0.0
    %1322 = vmatpush2.msra.mxu0 0.0
    %1323 = vmatprep.subr.mxu0 0.0
    %1324 = vmatpush2.msra.mxu0 0.0
    %1325 = vmatprep.subr.mxu0 0.0
    %1326 = vmatpush2.msra.mxu0 0.0
    %1327 = vmatprep.subr.mxu0 0.0
    %1328 = vmatpush2.msra.mxu0 0.0
    %1329 = vmatprep.subr.mxu0 0.0
    %1330 = vmatpush2.msra.mxu0 0.0
    %1331 = vmatprep.subr.mxu0 0.0
    %1332 = vmatpush2.msra.mxu0 0.0
    %1333 = vmatprep.subr.mxu0 0.0
    %1334 = vmatpush2.msra.mxu0 0.0
    %1335 = vmatprep.subr.mxu0 0.0
    %1336 = vmatpush2.msra.mxu0 0.0
    %1337 = vmatprep.subr.mxu0 0.0
    %1338 = vmatpush2.msra.mxu0 0.0
    %1339 = vmatprep.subr.mxu0 0.0
    %1340 = vmatpush2.msra.mxu0 0.0
    %1341 = vmatprep.subr.mxu0 0.0
    %1342 = vmatpush2.msra.mxu0 0.0
    %1343 = vmatprep.mubr.f32.mxu0 0.0
    %1344 = vmatmul.mubr.f32.gmra.mxu0 %v1277
    %v1345 = vpop.f32.mrf.mxu0
    %v1346 = vadd.f32 0.0, %v1345
    %v1347 = vpop.f32.mrf.mxu0
    %1348 = vdwg.mxu0
    %1349 = vrot.lane.b32.xlu0 %v154, 48
    %v1350 = vpop.permute.xlu0 %1349
    %v1353 = vsel %vm160, %v873, 0
    %1355 = vmatprep.subr.mxu0 0.0
    %1356 = vmatpush1.msra.mxu0 0.0
    %1357 = vmatprep.subr.mxu0 0.0
    %1358 = vmatpush1.msra.mxu0 0.0
    %1359 = vmatprep.subr.mxu0 0.0
    %1360 = vmatpush1.msra.mxu0 0.0
    %1361 = vmatprep.subr.mxu0 0.0
    %1362 = vmatpush1.msra.mxu0 0.0
    %1363 = vmatprep.subr.mxu0 0.0
    %1364 = vmatpush1.msra.mxu0 0.0
    %1365 = vmatprep.subr.mxu0 0.0
    %1366 = vmatpush1.msra.mxu0 0.0
    %1367 = vmatprep.subr.mxu0 0.0
    %1368 = vmatpush1.msra.mxu0 0.0
    %1369 = vmatprep.subr.mxu0 0.0
    %1370 = vmatpush1.msra.mxu0 0.0
    %1371 = vmatprep.subr.mxu0 0.0
    %1372 = vmatpush1.msra.mxu0 0.0
    %1373 = vmatprep.subr.mxu0 0.0
    %1374 = vmatpush1.msra.mxu0 0.0
    %1375 = vmatprep.subr.mxu0 0.0
    %1376 = vmatpush1.msra.mxu0 0.0
    %1377 = vmatprep.subr.mxu0 0.0
    %1378 = vmatpush1.msra.mxu0 0.0
    %1379 = vmatprep.subr.mxu0 0.0
    %1380 = vmatpush1.msra.mxu0 0.0
    %1381 = vmatprep.subr.mxu0 0.0
    %1382 = vmatpush1.msra.mxu0 0.0
    %1383 = vmatprep.subr.mxu0 0.0
    %1384 = vmatpush1.msra.mxu0 0.0
    %1385 = vmatprep.subr.mxu0 0.0
    %1386 = vmatpush1.msra.mxu0 %v1350
    %1387 = vmatprep.subr.mxu0 0.0
    %1388 = vmatpush2.msra.mxu0 0.0
    %1389 = vmatprep.subr.mxu0 0.0
    %1390 = vmatpush2.msra.mxu0 0.0
    %1391 = vmatprep.subr.mxu0 0.0
    %1392 = vmatpush2.msra.mxu0 0.0
    %1393 = vmatprep.subr.mxu0 0.0
    %1394 = vmatpush2.msra.mxu0 0.0
    %1395 = vmatprep.subr.mxu0 0.0
    %1396 = vmatpush2.msra.mxu0 0.0
    %1397 = vmatprep.subr.mxu0 0.0
    %1398 = vmatpush2.msra.mxu0 0.0
    %1399 = vmatprep.subr.mxu0 0.0
    %1400 = vmatpush2.msra.mxu0 0.0
    %1401 = vmatprep.subr.mxu0 0.0
    %1402 = vmatpush2.msra.mxu0 0.0
    %1403 = vmatprep.subr.mxu0 0.0
    %1404 = vmatpush2.msra.mxu0 0.0
    %1405 = vmatprep.subr.mxu0 0.0
    %1406 = vmatpush2.msra.mxu0 0.0
    %1407 = vmatprep.subr.mxu0 0.0
    %1408 = vmatpush2.msra.mxu0 0.0
    %1409 = vmatprep.subr.mxu0 0.0
    %1410 = vmatpush2.msra.mxu0 0.0
    %1411 = vmatprep.subr.mxu0 0.0
    %1412 = vmatpush2.msra.mxu0 0.0
    %1413 = vmatprep.subr.mxu0 0.0
    %1414 = vmatpush2.msra.mxu0 0.0
    %1415 = vmatprep.subr.mxu0 0.0
    %1416 = vmatpush2.msra.mxu0 0.0
    %1417 = vmatprep.subr.mxu0 0.0
    %1418 = vmatpush2.msra.mxu0 0.0
    %1419 = vmatprep.mubr.f32.mxu0 0.0
    %1420 = vmatmul.mubr.f32.gmra.mxu0 %v1353
    %v1421 = vpop.f32.mrf.mxu0
    %v1422 = vadd.f32 0.0, %v1421
    %v1423 = vpop.f32.mrf.mxu0
    %1424 = vdwg.mxu0
    %1425 = vrot.lane.b32.xlu0 %v154, 40
    %v1426 = vpop.permute.xlu0 %1425
    %v1429 = vsel %vm160, %v875, 0
    %1431 = vmatprep.subr.mxu0 0.0
    %1432 = vmatpush1.msra.mxu0 0.0
    %1433 = vmatprep.subr.mxu0 0.0
    %1434 = vmatpush1.msra.mxu0 0.0
    %1435 = vmatprep.subr.mxu0 0.0
    %1436 = vmatpush1.msra.mxu0 0.0
    %1437 = vmatprep.subr.mxu0 0.0
    %1438 = vmatpush1.msra.mxu0 0.0
    %1439 = vmatprep.subr.mxu0 0.0
    %1440 = vmatpush1.msra.mxu0 0.0
    %1441 = vmatprep.subr.mxu0 0.0
    %1442 = vmatpush1.msra.mxu0 0.0
    %1443 = vmatprep.subr.mxu0 0.0
    %1444 = vmatpush1.msra.mxu0 0.0
    %1445 = vmatprep.subr.mxu0 0.0
    %1446 = vmatpush1.msra.mxu0 0.0
    %1447 = vmatprep.subr.mxu0 0.0
    %1448 = vmatpush1.msra.mxu0 0.0
    %1449 = vmatprep.subr.mxu0 0.0
    %1450 = vmatpush1.msra.mxu0 0.0
    %1451 = vmatprep.subr.mxu0 0.0
    %1452 = vmatpush1.msra.mxu0 0.0
    %1453 = vmatprep.subr.mxu0 0.0
    %1454 = vmatpush1.msra.mxu0 0.0
    %1455 = vmatprep.subr.mxu0 0.0
    %1456 = vmatpush1.msra.mxu0 0.0
    %1457 = vmatprep.subr.mxu0 0.0
    %1458 = vmatpush1.msra.mxu0 0.0
    %1459 = vmatprep.subr.mxu0 0.0
    %1460 = vmatpush1.msra.mxu0 0.0
    %1461 = vmatprep.subr.mxu0 0.0
    %1462 = vmatpush1.msra.mxu0 %v1426
    %1463 = vmatprep.subr.mxu0 0.0
    %1464 = vmatpush2.msra.mxu0 0.0
    %1465 = vmatprep.subr.mxu0 0.0
    %1466 = vmatpush2.msra.mxu0 0.0
    %1467 = vmatprep.subr.mxu0 0.0
    %1468 = vmatpush2.msra.mxu0 0.0
    %1469 = vmatprep.subr.mxu0 0.0
    %1470 = vmatpush2.msra.mxu0 0.0
    %1471 = vmatprep.subr.mxu0 0.0
    %1472 = vmatpush2.msra.mxu0 0.0
    %1473 = vmatprep.subr.mxu0 0.0
    %1474 = vmatpush2.msra.mxu0 0.0
    %1475 = vmatprep.subr.mxu0 0.0
    %1476 = vmatpush2.msra.mxu0 0.0
    %1477 = vmatprep.subr.mxu0 0.0
    %1478 = vmatpush2.msra.mxu0 0.0
    %1479 = vmatprep.subr.mxu0 0.0
    %1480 = vmatpush2.msra.mxu0 0.0
    %1481 = vmatprep.subr.mxu0 0.0
    %1482 = vmatpush2.msra.mxu0 0.0
    %1483 = vmatprep.subr.mxu0 0.0
    %1484 = vmatpush2.msra.mxu0 0.0
    %1485 = vmatprep.subr.mxu0 0.0
    %1486 = vmatpush2.msra.mxu0 0.0
    %1487 = vmatprep.subr.mxu0 0.0
    %1488 = vmatpush2.msra.mxu0 0.0
    %1489 = vmatprep.subr.mxu0 0.0
    %1490 = vmatpush2.msra.mxu0 0.0
    %1491 = vmatprep.subr.mxu0 0.0
    %1492 = vmatpush2.msra.mxu0 0.0
    %1493 = vmatprep.subr.mxu0 0.0
    %1494 = vmatpush2.msra.mxu0 0.0
    %1495 = vmatprep.mubr.f32.mxu0 0.0
    %1496 = vmatmul.mubr.f32.gmra.mxu0 %v1429
    %v1497 = vpop.f32.mrf.mxu0
    %v1498 = vadd.f32 0.0, %v1497
    %v1499 = vpop.f32.mrf.mxu0
    %1500 = vdwg.mxu0
    %1502 = vrot.lane.b32.xlu0 %v1346, 8
    %v1503 = vpop.permute.xlu0 %1502
    %1506 = vrot.lane.b32.xlu0 %v1422, 16
    %v1507 = vpop.permute.xlu0 %1506
    %1510 = vrot.lane.b32.xlu0 %v1498, 24
    %v1511 = vpop.permute.xlu0 %1510
    %v1513 = vsel %vm160, %v1270, %v1503
    %v1514 = vsel %vm1193, %v1513, %v1507
    %v1515 = vsel %vm1195, %v1514, %v1511
    %v1516 = vld [vmem:[#allocation7] sm:$0xff]
    %v1517 = vld [vmem:[#allocation7 + $0x8] sm:$0xff]
    %v1518 = vld [vmem:[#allocation7 + $0x10] sm:$0xff]
    %v1519 = vld [vmem:[#allocation7 + $0x18] sm:$0xff]
    %v1520 = vld [vmem:[%s4] sm:$0x1]
    %v1522 = vlaneseq
    %v1523 = vshrl.u32 %v1522, 7
    %v1524 = vsub.s32 0, %v1523
    %v1525 = vrot.slane %v1520, %v1524
    %v1528 = vsel %vm75, %v1196, 0
    %v1531 = vsel %vm75, %v1515, 0
    %1533 = vmatprep.subr.mxu0 0.0
    %1534 = vmatpush1.msra.mxu0 0.0
    %1535 = vmatprep.subr.mxu0 0.0
    %1536 = vmatpush1.msra.mxu0 0.0
    %1537 = vmatprep.subr.mxu0 0.0
    %1538 = vmatpush1.msra.mxu0 0.0
    %1539 = vmatprep.subr.mxu0 0.0
    %1540 = vmatpush1.msra.mxu0 0.0
    %1541 = vmatprep.subr.mxu0 0.0
    %1542 = vmatpush1.msra.mxu0 0.0
    %1543 = vmatprep.subr.mxu0 0.0
    %1544 = vmatpush1.msra.mxu0 0.0
    %1545 = vmatprep.subr.mxu0 0.0
    %1546 = vmatpush1.msra.mxu0 0.0
    %1547 = vmatprep.subr.mxu0 0.0
    %1548 = vmatpush1.msra.mxu0 0.0
    %1549 = vmatprep.subr.mxu0 0.0
    %1550 = vmatpush1.msra.mxu0 0.0
    %1551 = vmatprep.subr.mxu0 0.0
    %1552 = vmatpush1.msra.mxu0 0.0
    %1553 = vmatprep.subr.mxu0 0.0
    %1554 = vmatpush1.msra.mxu0 0.0
    %1555 = vmatprep.subr.mxu0 0.0
    %1556 = vmatpush1.msra.mxu0 0.0
    %1557 = vmatprep.subr.mxu0 0.0
    %1558 = vmatpush1.msra.mxu0 %v1519
    %1559 = vmatprep.subr.mxu0 0.0
    %1560 = vmatpush1.msra.mxu0 %v1518
    %1561 = vmatprep.subr.mxu0 0.0
    %1562 = vmatpush1.msra.mxu0 %v1517
    %1563 = vmatprep.subr.mxu0 0.0
    %1564 = vmatpush1.msra.mxu0 %v1516
    %1565 = vmatprep.subr.mxu0 0.0
    %1566 = vmatpush2.msra.mxu0 0.0
    %1567 = vmatprep.subr.mxu0 0.0
    %1568 = vmatpush2.msra.mxu0 0.0
    %1569 = vmatprep.subr.mxu0 0.0
    %1570 = vmatpush2.msra.mxu0 0.0
    %1571 = vmatprep.subr.mxu0 0.0
    %1572 = vmatpush2.msra.mxu0 0.0
    %1573 = vmatprep.subr.mxu0 0.0
    %1574 = vmatpush2.msra.mxu0 0.0
    %1575 = vmatprep.subr.mxu0 0.0
    %1576 = vmatpush2.msra.mxu0 0.0
    %1577 = vmatprep.subr.mxu0 0.0
    %1578 = vmatpush2.msra.mxu0 0.0
    %1579 = vmatprep.subr.mxu0 0.0
    %1580 = vmatpush2.msra.mxu0 0.0
    %1581 = vmatprep.subr.mxu0 0.0
    %1582 = vmatpush2.msra.mxu0 0.0
    %1583 = vmatprep.subr.mxu0 0.0
    %1584 = vmatpush2.msra.mxu0 0.0
    %1585 = vmatprep.subr.mxu0 0.0
    %1586 = vmatpush2.msra.mxu0 0.0
    %1587 = vmatprep.subr.mxu0 0.0
    %1588 = vmatpush2.msra.mxu0 0.0
    %1589 = vmatprep.subr.mxu0 0.0
    %1590 = vmatpush2.msra.mxu0 0.0
    %1591 = vmatprep.subr.mxu0 0.0
    %1592 = vmatpush2.msra.mxu0 0.0
    %1593 = vmatprep.subr.mxu0 0.0
    %1594 = vmatpush2.msra.mxu0 0.0
    %1595 = vmatprep.subr.mxu0 0.0
    %1596 = vmatpush2.msra.mxu0 0.0
    %1597 = vmatprep.mubr.f32.mxu0 0.0
    %1598 = vmatmul.mubr.f32.gmra.mxu0 %v1528
    %v1599 = vpop.f32.mrf.mxu0
    %v1600 = vadd.f32 %v1525, %v1599
    %v1601 = vpop.f32.mrf.mxu0
    %1602 = vmatprep.mubr.f32.mxu0 0.0
    %1603 = vmatmul.mubr.f32.gmra.mxu0 %v1531
    %v1604 = vpop.f32.mrf.mxu0
    %v1605 = vadd.f32 %v1525, %v1604
    %v1606 = vpop.f32.mrf.mxu0
    %1607 = vdwg.mxu0
    %1608 = vst.msk [vmem:[#allocation8] sm:$0xff] %vm75, %v1600
    %1609 = vst.msk [vmem:[#allocation8 + $0x8] sm:$0xff] %vm75, %v1605
    // Predicated region
    $region34: #{tpu_custom_call.1} parent=1 // pred_check
      _
    $region35: #{tpu_custom_call.1} parent=1 // pred_check_branch
      %1611 = sbr.rel (0) target = $region37
    $region36: #{tpu_custom_call.1} parent=1 // pred_region
      %s1613 = ssub.s32 256, 256
      %1614 = vsyncadd [#allocation4], %s1613
      %s1615 = sshll.u32 [#allocation8], 4
      %s1616 = int_to_ptr.vmem [resolvable:$true] %s1615
      %1621 = dma.vmem_to_hbm [thread:$0]  %s1616, 256, %s5, [#allocation4], 128, 128, 8
    $region37: #{tpu_custom_call.1} parent=1 // pred_fallthru
      _
    // Predicated region
    $region38: #{tpu_custom_call.1} parent=1 // pred_check
      _
    $region39: #{tpu_custom_call.1} parent=1 // pred_check_branch
      %1623 = sbr.rel (0) target = $region41
    $region40: #{tpu_custom_call.1} parent=1 // pred_region
      %1624 = dma.done [#allocation4], 256
    $region41: #{tpu_custom_call.1} parent=1 // pred_fallthru
      _
    %1625 = vsyncpa [#allocation3], 1
    %1626 = vsyncpa [#allocation6], 1
    %1627 = vsyncpa [#allocation4], 1

</llo_original>
